<compile_context>
chip_gen: v7x
topology: tpu7x:2x2x1
jax: 0.10.0
libtpu: 0.0.40
codegen_flags: <defaults>
</compile_context>

<pallas_src>
import functools

import jax
import jax.numpy as jnp
from jax import lax
from jax.experimental import pallas as pl
from jax.experimental.pallas import tpu as pltpu

_PAD = 16  # guard rows before/after the flat mid scratch (never written; reads
           # into them are always masked with jnp.where, so contents are inert)


# ----------------------------- fused kernel ---------------------------------

def _bottleneck_kernel(x_ref, w1_ref, b1_ref, w2_ref, b2_ref, w3_ref, b3_ref,
                       o_ref, midc_ref):
    # x    : (1, H, W, Cin)        bf16   whole image (revisited across strips)
    # w1   : (Cin, Cmid)           bf16   1x1 conv, BN scale folded
    # w2   : (3, 3*Cmid, Cmid)     bf16   3x3 conv, kh-major, K = [kw0|kw1|kw2]*Cmid
    # w3   : (Cmid, Cexp)          bf16   1x1 conv, BN scale folded
    # b*   : (1, C)                f32    BN bias
    # o    : (1, Hs, W, Cexp)      bf16   output strip
    # midc : VMEM (_PAD + (Hs+2)*W + _PAD, Cmid) bf16  flat stage-1 output
    H = x_ref.shape[1]
    W = x_ref.shape[2]
    Cin = x_ref.shape[3]
    Cmid = w1_ref.shape[1]
    Hs = o_ref.shape[1]
    L = Hs * W                # output rows of this strip
    Lw = (Hs + 2) * W         # rows incl. 1-row halo above/below

    s = pl.program_id(1)
    S = pl.num_programs(1)
    row0 = pl.multiple_of(s * Hs, Hs)

    # ---- gather strip + 1-row halo from the whole-image x block (bf16) ------
    top = jnp.maximum(row0 - 1, 0)            # clamped; masked to zero below
    bot = jnp.minimum(row0 + Hs, H - 1)
    x_top = x_ref[0, pl.ds(top, 1), :, :]     # (1,  W, Cin)
    x_mid = x_ref[0, pl.ds(row0, Hs), :, :]   # (Hs, W, Cin)
    x_bot = x_ref[0, pl.ds(bot, 1), :, :]     # (1,  W, Cin)
    xwin = jnp.concatenate([x_top, x_mid, x_bot], axis=0)   # (Hs+2, W, Cin)
    xw2d = xwin.reshape(Lw, Cin)              # layout-preserving (W % 8 == 0)

    # ---- stage 1: 1x1 conv (scale folded) + bias + ReLU ---------------------
    h1 = jnp.dot(xw2d, w1_ref[...], preferred_element_type=jnp.float32)
    mid = jnp.maximum(h1 + b1_ref[...], 0.0)
    # zero the halo rows that fall outside the image (conv2's zero padding)
    r = lax.broadcasted_iota(jnp.int32, (Lw, 1), 0)
    valid = jnp.logical_and(jnp.logical_or(s > 0, r >= W),
                            jnp.logical_or(s < S - 1, r < (Hs + 1) * W))
    mid = jnp.where(valid, mid, 0.0)
    # single store of the whole strip(+halo); guard rows are never written.
    midc_ref[pl.ds(_PAD, Lw), :] = mid.astype(jnp.bfloat16)

    # ---- stage 2: 3x3 conv as 3 matmuls (kw taps fused into K = 3*Cmid) -----
    o_idx = lax.broadcasted_iota(jnp.int32, (L, 1), 0)
    not_left = (o_idx % W) != 0              # kw=0 tap invalid at w == 0
    not_right = (o_idx % W) != (W - 1)       # kw=2 tap invalid at w == W-1
    acc = None
    for kh in range(3):                      # static unroll
        base = _PAD + kh * W
        p0 = midc_ref[pl.ds(base - 1, L), :]   # kw = 0 (shift left)
        p1 = midc_ref[pl.ds(base, L), :]       # kw = 1 (center)
        p2 = midc_ref[pl.ds(base + 1, L), :]   # kw = 2 (shift right)
        zero = jnp.zeros_like(p1)
        patch = jnp.concatenate(
            [jnp.where(not_left, p0, zero), p1, jnp.where(not_right, p2, zero)],
            axis=1)                            # (L, 3*Cmid) bf16
        contrib = jnp.dot(patch, w2_ref[kh], preferred_element_type=jnp.float32)
        acc = contrib if acc is None else acc + contrib
    mid2 = jnp.maximum(acc + b2_ref[...], 0.0).astype(jnp.bfloat16)

    # ---- stage 3: 1x1 conv + bias + residual add + ReLU ---------------------
    y = jnp.dot(mid2, w3_ref[...], preferred_element_type=jnp.float32)
    res = x_mid.reshape(L, Cin).astype(jnp.float32)
    y = jnp.maximum(y + b3_ref[...] + res, 0.0)
    o_ref[0, :, :, :] = y.reshape(Hs, W, -1).astype(o_ref.dtype)


# ------------------------------- wrappers ------------------------------------

def _bottleneck_forward_nhwc(x_nhwc, params, *, strip_rows=8):
    x = x_nhwc.astype(jnp.bfloat16)            # bf16 activation I/O
    N, H, W, Cin = x.shape

    # Fold BN scale into conv weights in f32, cast once to bf16.
    w1 = (params["w1"] * params["s1"]).astype(jnp.bfloat16)    # (Cin, Cmid)
    w2 = (params["w2"] * params["s2"]).astype(jnp.bfloat16)    # (3, 3*Cmid, Cmid)
    w3 = (params["w3"] * params["s3"]).astype(jnp.bfloat16)    # (Cmid, Cexp)
    b1 = params["b1"].astype(jnp.float32)
    b2 = params["b2"].astype(jnp.float32)
    b3 = params["b3"].astype(jnp.float32)
    Cmid = w1.shape[1]
    Cexp = w3.shape[1]
    assert Cin == Cexp, "identity path requires Cin == expansion*out_channel"
    assert W % 8 == 0, "W must be sublane-aligned (multiple of 8)"

    Hs = strip_rows if (strip_rows <= H and H % strip_rows == 0) else H
    S = H // Hs

    def weight_spec(shape):
        return pl.BlockSpec(shape, lambda n, s: (0,) * len(shape),
                            pipeline_mode=pl.Buffered(1))

    out = pl.pallas_call(
        _bottleneck_kernel,
        out_shape=jax.ShapeDtypeStruct((N, H, W, Cexp), jnp.bfloat16),
        grid=(N, S),
        in_specs=[
            # Whole image per step; index map is constant over the strip axis so
            # the block is DMA'd once per image and revisited for every strip.
            pl.BlockSpec((1, H, W, Cin), lambda n, s: (n, 0, 0, 0)),
            weight_spec((Cin, Cmid)),
            weight_spec((1, Cmid)),
            weight_spec((3, 3 * Cmid, Cmid)),
            weight_spec((1, Cmid)),
            weight_spec((Cmid, Cexp)),
            weight_spec((1, Cexp)),
        ],
        out_specs=pl.BlockSpec((1, Hs, W, Cexp), lambda n, s: (n, s, 0, 0)),
        scratch_shapes=[
            pltpu.VMEM((_PAD + (Hs + 2) * W + _PAD, Cmid), jnp.bfloat16),
        ],
        compiler_params=pltpu.CompilerParams(
            dimension_semantics=("parallel", "parallel")),
    )(x, w1, b1, w2, b2, w3, b3)
    return out


@functools.partial(jax.jit, static_argnames=("strip_rows",))
def bottleneck_forward(x_nchw, params, *, strip_rows=8):
    """Bottleneck forward. x_nchw: (N, Cin, H, W). stride=1, downsample=None."""
    # TODO(synk): keep the model NHWC end-to-end to drop these transposes.
    x = jnp.transpose(x_nchw, (0, 2, 3, 1))
    out = _bottleneck_forward_nhwc(x, params, strip_rows=strip_rows)
    return jnp.transpose(out, (0, 3, 1, 2))


# --------------------------- parameters --------------------------------------

def init_params(key, in_channel, out_channel, expansion=4, eps=1e-5):
    C, Ce = out_channel, out_channel * expansion
    ks = jax.random.split(key, 9)
    # PyTorch conv weight layouts (OIHW), converted for the kernel.
    w1_t = jax.random.normal(ks[0], (C, in_channel, 1, 1), jnp.float32) * 0.1
    w2_t = jax.random.normal(ks[1], (C, C, 3, 3), jnp.float32) * 0.1
    w3_t = jax.random.normal(ks[2], (Ce, C, 1, 1), jnp.float32) * 0.1

    def bn(kg, kb, n):
        gamma = 1.0 + 0.1 * jax.random.normal(kg, (n,), jnp.float32)
        beta = 0.1 * jax.random.normal(kb, (n,), jnp.float32)
        mean = jnp.zeros((n,), jnp.float32)   # running stats (eval mode)
        var = jnp.ones((n,), jnp.float32)
        s = gamma / jnp.sqrt(var + eps)
        b = beta - mean * s
        return s.reshape(1, n), b.reshape(1, n)

    s1, b1 = bn(ks[3], ks[4], C)
    s2, b2 = bn(ks[5], ks[6], C)
    s3, b3 = bn(ks[7], ks[8], Ce)

    w2_hwio = jnp.transpose(w2_t, (2, 3, 1, 0))                 # (kh, kw, cin, cout)
    return dict(
        w1=jnp.transpose(w1_t[:, :, 0, 0], (1, 0)),             # (Cin, C)
        w2=w2_hwio.reshape(3, 3 * C, C),                        # (kh, kw*C + cin, cout)
        w3=jnp.transpose(w3_t[:, :, 0, 0], (1, 0)),             # (C, Ce)
        s1=s1, b1=b1, s2=s2, b2=b2, s3=s3, b3=b3,
    )


# --------------------------- reference (pure JAX, f32) ------------------------

def bottleneck_reference(x_nchw, params):
    x = jnp.transpose(x_nchw, (0, 2, 3, 1))
    # The kernel consumes bf16 activations; match that input quantization so the
    # comparison isolates kernel error.
    x = x.astype(jnp.bfloat16).astype(jnp.float32)
    C = params["w1"].shape[1]
    out = jnp.maximum(jnp.einsum("nhwc,cd->nhwd", x, params["w1"])
                      * params["s1"] + params["b1"], 0.0)
    w2 = params["w2"].reshape(3, 3, C, C)  # HWIO
    out = lax.conv_general_dilated(
        out, w2, (1, 1), "SAME", dimension_numbers=("NHWC", "HWIO", "NHWC"))
    out = jnp.maximum(out * params["s2"] + params["b2"], 0.0)
    out = (jnp.einsum("nhwc,cd->nhwd", out, params["w3"])
           * params["s3"] + params["b3"] + x)
    out = jnp.maximum(out, 0.0)
    return jnp.transpose(out, (0, 3, 1, 2))


# ------------------------------ main ------------------------------------------

if __name__ == "__main__":
    key = jax.random.PRNGKey(0)
    k_x, k_p = jax.random.split(key)

    # Bottleneck(in_channel=128, out_channel=32): expansion=4 keeps the identity
    # add valid and makes the output lane-dense (Cexp = 128).
    N, Cin, H, W = 2, 128, 16, 16
    out_channel = 32

    x = jax.random.normal(k_x, (N, Cin, H, W), jnp.float32)
    params = init_params(k_p, in_channel=Cin, out_channel=out_channel)

    y = jax.block_until_ready(bottleneck_forward(x, params))
    y_ref = jax.block_until_ready(bottleneck_reference(x, params))

    assert y.shape == (N, out_channel * 4, H, W), y.shape
    y32 = y.astype(jnp.float32)
    err = float(jnp.max(jnp.abs(y32 - y_ref)))
    # bf16 activations + bf16 MXU operands with f32 accumulation -> loose tol.
    assert jnp.allclose(y32, y_ref, atol=3e-2, rtol=3e-2), err

    print("KERNEL_OK")
</pallas_src>

<mosaic_0001>
module attributes {stable_mosaic.version = 11 : i64} {
  func.func @_bottleneck_kernel(%arg0: i32, %arg1: i32, %arg2: memref<1x16x16x128xbf16, #tpu.memory_space<vmem>>, %arg3: memref<128x32xbf16, #tpu.memory_space<vmem>>, %arg4: memref<1x32xf32, #tpu.memory_space<vmem>>, %arg5: memref<3x96x32xbf16, #tpu.memory_space<vmem>>, %arg6: memref<1x32xf32, #tpu.memory_space<vmem>>, %arg7: memref<32x128xbf16, #tpu.memory_space<vmem>>, %arg8: memref<1x128xf32, #tpu.memory_space<vmem>>, %arg9: memref<1x8x16x128xbf16, #tpu.memory_space<vmem>>, %arg10: memref<192x32xbf16, #tpu.memory_space<vmem>>) attributes {dimension_semantics = [#tpu.dimension_semantics<parallel>, #tpu.dimension_semantics<parallel>], iteration_bounds = array<i64: 2, 2>, scalar_prefetch = 0 : i64, scratch_operands = 1 : i64, tpu.core_type = #tpu.core_type<tc>, window_params = [{transform_indices = @transform_0, window_bounds = array<i64: 1, 16, 16, 128>}, {pipeline_mode = #tpu.pipeline_mode<synchronous>, transform_indices = @transform_1, window_bounds = array<i64: 128, 32>}, {pipeline_mode = #tpu.pipeline_mode<synchronous>, transform_indices = @transform_2, window_bounds = array<i64: 1, 32>}, {pipeline_mode = #tpu.pipeline_mode<synchronous>, transform_indices = @transform_3, window_bounds = array<i64: 3, 96, 32>}, {pipeline_mode = #tpu.pipeline_mode<synchronous>, transform_indices = @transform_4, window_bounds = array<i64: 1, 32>}, {pipeline_mode = #tpu.pipeline_mode<synchronous>, transform_indices = @transform_5, window_bounds = array<i64: 32, 128>}, {pipeline_mode = #tpu.pipeline_mode<synchronous>, transform_indices = @transform_6, window_bounds = array<i64: 1, 128>}, {transform_indices = @transform_7, window_bounds = array<i64: 1, 8, 16, 128>}]} {
    %c8_i32 = arith.constant 8 : i32
    %0 = arith.muli %arg1, %c8_i32 : i32
    %1 = tpu.assume_multiple %0, 8 : i32
    %c1_i32 = arith.constant 1 : i32
    %2 = arith.subi %1, %c1_i32 : i32
    %c0_i32 = arith.constant 0 : i32
    %3 = arith.maxsi %2, %c0_i32 : i32
    %c8_i32_0 = arith.constant 8 : i32
    %4 = arith.addi %1, %c8_i32_0 : i32
    %c15_i32 = arith.constant 15 : i32
    %5 = arith.minsi %4, %c15_i32 : i32
    %c0 = arith.constant 0 : index
    %6 = arith.index_cast %3 : i32 to index
    %c0_1 = arith.constant 0 : index
    %c0_2 = arith.constant 0 : index
    %7 = vector.load %arg2[%c0, %6, %c0_1, %c0_2] : memref<1x16x16x128xbf16, #tpu.memory_space<vmem>>, vector<1x1x16x128xbf16>
    %8 = vector.shape_cast %7 : vector<1x1x16x128xbf16> to vector<1x16x128xbf16>
    %c0_3 = arith.constant 0 : index
    %9 = arith.index_cast %1 : i32 to index
    %c0_4 = arith.constant 0 : index
    %c0_5 = arith.constant 0 : index
    %10 = vector.load %arg2[%c0_3, %9, %c0_4, %c0_5] : memref<1x16x16x128xbf16, #tpu.memory_space<vmem>>, vector<1x8x16x128xbf16>
    %11 = vector.shape_cast %10 : vector<1x8x16x128xbf16> to vector<8x16x128xbf16>
    %c0_6 = arith.constant 0 : index
    %12 = arith.index_cast %5 : i32 to index
    %c0_7 = arith.constant 0 : index
    %c0_8 = arith.constant 0 : index
    %13 = vector.load %arg2[%c0_6, %12, %c0_7, %c0_8] : memref<1x16x16x128xbf16, #tpu.memory_space<vmem>>, vector<1x1x16x128xbf16>
    %14 = vector.shape_cast %13 : vector<1x1x16x128xbf16> to vector<1x16x128xbf16>
    %15 = tpu.concatenate %8, %11, %14 in 0 : vector<1x16x128xbf16>, vector<8x16x128xbf16>, vector<1x16x128xbf16> -> vector<10x16x128xbf16>
    %16 = vector.shape_cast %15 : vector<10x16x128xbf16> to vector<160x128xbf16>
    %c0_9 = arith.constant 0 : index
    %c0_10 = arith.constant 0 : index
    %17 = vector.load %arg3[%c0_9, %c0_10] : memref<128x32xbf16, #tpu.memory_space<vmem>>, vector<128x32xbf16>
    %cst = arith.constant dense<0.000000e+00> : vector<160x32xf32>
    %18 = tpu.matmul %16, %17, %cst {dimension_numbers = #tpu.dot_dimension_numbers<[1], [0], [0], [1], [0, 0, 1, 1], [], []>} : vector<160x128xbf16>, vector<128x32xbf16>, vector<160x32xf32> -> vector<160x32xf32>
    %c0_11 = arith.constant 0 : index
    %c0_12 = arith.constant 0 : index
    %19 = vector.load %arg4[%c0_11, %c0_12] : memref<1x32xf32, #tpu.memory_space<vmem>>, vector<1x32xf32>
    %20 = vector.broadcast %19 : vector<1x32xf32> to vector<160x32xf32>
    %21 = arith.addf %18, %20 : vector<160x32xf32>
    %cst_13 = arith.constant 0.000000e+00 : f32
    %22 = vector.broadcast %cst_13 : f32 to vector<160x32xf32>
    %23 = arith.maximumf %21, %22 : vector<160x32xf32>
    %24 = tpu.iota {dimensions = array<i32: 0>} : vector<160x1xi32>
    %c0_i32_14 = arith.constant 0 : i32
    %25 = arith.cmpi sgt, %arg1, %c0_i32_14 : i32
    %c16_i32 = arith.constant 16 : i32
    %26 = vector.broadcast %c16_i32 : i32 to vector<160x1xi32>
    %27 = arith.cmpi sge, %24, %26 : vector<160x1xi32>
    %28 = vector.broadcast %25 : i1 to vector<160x1xi1>
    %29 = arith.ori %28, %27 : vector<160x1xi1>
    %c1_i32_15 = arith.constant 1 : i32
    %30 = arith.cmpi slt, %arg1, %c1_i32_15 : i32
    %c144_i32 = arith.constant 144 : i32
    %31 = vector.broadcast %c144_i32 : i32 to vector<160x1xi32>
    %32 = arith.cmpi slt, %24, %31 : vector<160x1xi32>
    %33 = vector.broadcast %30 : i1 to vector<160x1xi1>
    %34 = arith.ori %33, %32 : vector<160x1xi1>
    %35 = arith.andi %29, %34 : vector<160x1xi1>
    %cst_16 = arith.constant 0.000000e+00 : f32
    %36 = vector.shape_cast %35 : vector<160x1xi1> to vector<160x1xi1>
    %37 = vector.broadcast %36 : vector<160x1xi1> to vector<160x32xi1>
    %38 = vector.broadcast %cst_16 : f32 to vector<160x32xf32>
    %39 = arith.select %37, %23, %38 : vector<160x32xi1>, vector<160x32xf32>
    %40 = arith.truncf %39 : vector<160x32xf32> to vector<160x32xbf16>
    %c16 = arith.constant 16 : index
    %c0_17 = arith.constant 0 : index
    %41 = vector.load %arg10[%c16, %c0_17] : memref<192x32xbf16, #tpu.memory_space<vmem>>, vector<160x32xbf16>
    tpu.vector_store %arg10[%c16, %c0_17], %40 {strides = array<i32>} : memref<192x32xbf16, #tpu.memory_space<vmem>>, vector<160x32xbf16>,
    %42 = tpu.iota {dimensions = array<i32: 0>} : vector<128x1xi32>
    %c16_i32_18 = arith.constant 16 : i32
    %c0_i32_19 = arith.constant 0 : i32
    %43 = arith.cmpi eq, %c16_i32_18, %c0_i32_19 : i32
    %c1_i32_20 = arith.constant 1 : i32
    %44 = arith.select %43, %c1_i32_20, %c16_i32_18 : i32
    %45 = vector.broadcast %44 : i32 to vector<128x1xi32>
    %46 = arith.remsi %42, %45 : vector<128x1xi32>
    %c0_i32_21 = arith.constant 0 : i32
    %47 = vector.broadcast %c0_i32_21 : i32 to vector<128x1xi32>
    %48 = arith.cmpi ne, %46, %47 : vector<128x1xi32>
    %c0_i32_22 = arith.constant 0 : i32
    %49 = vector.broadcast %c0_i32_22 : i32 to vector<128x1xi32>
    %50 = arith.cmpi slt, %46, %49 : vector<128x1xi32>
    %c0_i32_23 = arith.constant 0 : i32
    %51 = arith.cmpi slt, %44, %c0_i32_23 : i32
    %52 = vector.broadcast %51 : i1 to vector<128x1xi1>
    %53 = vector.broadcast %52 : vector<128x1xi1> to vector<128x1xi1>
    %54 = arith.xori %50, %53 : vector<128x1xi1>
    %55 = arith.andi %54, %48 : vector<128x1xi1>
    %56 = vector.broadcast %44 : i32 to vector<128x1xi32>
    %57 = arith.addi %46, %56 : vector<128x1xi32>
    %58 = arith.select %55, %57, %46 : vector<128x1xi1>, vector<128x1xi32>
    %c0_i32_24 = arith.constant 0 : i32
    %59 = vector.broadcast %c0_i32_24 : i32 to vector<128x1xi32>
    %60 = arith.cmpi ne, %58, %59 : vector<128x1xi32>
    %c16_i32_25 = arith.constant 16 : i32
    %c0_i32_26 = arith.constant 0 : i32
    %61 = arith.cmpi eq, %c16_i32_25, %c0_i32_26 : i32
    %c1_i32_27 = arith.constant 1 : i32
    %62 = arith.select %61, %c1_i32_27, %c16_i32_25 : i32
    %63 = vector.broadcast %62 : i32 to vector<128x1xi32>
    %64 = arith.remsi %42, %63 : vector<128x1xi32>
    %c0_i32_28 = arith.constant 0 : i32
    %65 = vector.broadcast %c0_i32_28 : i32 to vector<128x1xi32>
    %66 = arith.cmpi ne, %64, %65 : vector<128x1xi32>
    %c0_i32_29 = arith.constant 0 : i32
    %67 = vector.broadcast %c0_i32_29 : i32 to vector<128x1xi32>
    %68 = arith.cmpi slt, %64, %67 : vector<128x1xi32>
    %c0_i32_30 = arith.constant 0 : i32
    %69 = arith.cmpi slt, %62, %c0_i32_30 : i32
    %70 = vector.broadcast %69 : i1 to vector<128x1xi1>
    %71 = vector.broadcast %70 : vector<128x1xi1> to vector<128x1xi1>
    %72 = arith.xori %68, %71 : vector<128x1xi1>
    %73 = arith.andi %72, %66 : vector<128x1xi1>
    %74 = vector.broadcast %62 : i32 to vector<128x1xi32>
    %75 = arith.addi %64, %74 : vector<128x1xi32>
    %76 = arith.select %73, %75, %64 : vector<128x1xi1>, vector<128x1xi32>
    %c15_i32_31 = arith.constant 15 : i32
    %77 = vector.broadcast %c15_i32_31 : i32 to vector<128x1xi32>
    %78 = arith.cmpi ne, %76, %77 : vector<128x1xi32>
    %c15 = arith.constant 15 : index
    %c0_32 = arith.constant 0 : index
    %79 = vector.load %arg10[%c15, %c0_32] : memref<192x32xbf16, #tpu.memory_space<vmem>>, vector<128x32xbf16>
    %c16_33 = arith.constant 16 : index
    %c0_34 = arith.constant 0 : index
    %80 = vector.load %arg10[%c16_33, %c0_34] : memref<192x32xbf16, #tpu.memory_space<vmem>>, vector<128x32xbf16>
    %c17 = arith.constant 17 : index
    %c0_35 = arith.constant 0 : index
    %81 = vector.load %arg10[%c17, %c0_35] : memref<192x32xbf16, #tpu.memory_space<vmem>>, vector<128x32xbf16>
    %cst_36 = arith.constant 0.000000e+00 : bf16
    %82 = vector.broadcast %cst_36 : bf16 to vector<128x32xbf16>
    %83 = vector.shape_cast %60 : vector<128x1xi1> to vector<128x1xi1>
    %84 = vector.broadcast %83 : vector<128x1xi1> to vector<128x32xi1>
    %85 = arith.select %84, %79, %82 : vector<128x32xi1>, vector<128x32xbf16>
    %86 = vector.shape_cast %78 : vector<128x1xi1> to vector<128x1xi1>
    %87 = vector.broadcast %86 : vector<128x1xi1> to vector<128x32xi1>
    %88 = arith.select %87, %81, %82 : vector<128x32xi1>, vector<128x32xbf16>
    %89 = tpu.concatenate %85, %80, %88 in 1 : vector<128x32xbf16>, vector<128x32xbf16>, vector<128x32xbf16> -> vector<128x96xbf16>
    %c0_37 = arith.constant 0 : index
    %c0_38 = arith.constant 0 : index
    %c0_39 = arith.constant 0 : index
    %90 = vector.load %arg5[%c0_37, %c0_38, %c0_39] : memref<3x96x32xbf16, #tpu.memory_space<vmem>>, vector<1x96x32xbf16>
    %91 = vector.shape_cast %90 : vector<1x96x32xbf16> to vector<96x32xbf16>
    %cst_40 = arith.constant dense<0.000000e+00> : vector<128x32xf32>
    %92 = tpu.matmul %89, %91, %cst_40 {dimension_numbers = #tpu.dot_dimension_numbers<[1], [0], [0], [1], [0, 0, 1, 1], [], []>} : vector<128x96xbf16>, vector<96x32xbf16>, vector<128x32xf32> -> vector<128x32xf32>
    %c31 = arith.constant 31 : index
    %c0_41 = arith.constant 0 : index
    %93 = vector.load %arg10[%c31, %c0_41] : memref<192x32xbf16, #tpu.memory_space<vmem>>, vector<128x32xbf16>
    %c32 = arith.constant 32 : index
    %c0_42 = arith.constant 0 : index
    %94 = vector.load %arg10[%c32, %c0_42] : memref<192x32xbf16, #tpu.memory_space<vmem>>, vector<128x32xbf16>
    %c33 = arith.constant 33 : index
    %c0_43 = arith.constant 0 : index
    %95 = vector.load %arg10[%c33, %c0_43] : memref<192x32xbf16, #tpu.memory_space<vmem>>, vector<128x32xbf16>
    %cst_44 = arith.constant 0.000000e+00 : bf16
    %96 = vector.broadcast %cst_44 : bf16 to vector<128x32xbf16>
    %97 = vector.shape_cast %60 : vector<128x1xi1> to vector<128x1xi1>
    %98 = vector.broadcast %97 : vector<128x1xi1> to vector<128x32xi1>
    %99 = arith.select %98, %93, %96 : vector<128x32xi1>, vector<128x32xbf16>
    %100 = vector.shape_cast %78 : vector<128x1xi1> to vector<128x1xi1>
    %101 = vector.broadcast %100 : vector<128x1xi1> to vector<128x32xi1>
    %102 = arith.select %101, %95, %96 : vector<128x32xi1>, vector<128x32xbf16>
    %103 = tpu.concatenate %99, %94, %102 in 1 : vector<128x32xbf16>, vector<128x32xbf16>, vector<128x32xbf16> -> vector<128x96xbf16>
    %c1 = arith.constant 1 : index
    %c0_45 = arith.constant 0 : index
    %c0_46 = arith.constant 0 : index
    %104 = vector.load %arg5[%c1, %c0_45, %c0_46] : memref<3x96x32xbf16, #tpu.memory_space<vmem>>, vector<1x96x32xbf16>
    %105 = vector.shape_cast %104 : vector<1x96x32xbf16> to vector<96x32xbf16>
    %cst_47 = arith.constant dense<0.000000e+00> : vector<128x32xf32>
    %106 = tpu.matmul %103, %105, %cst_47 {dimension_numbers = #tpu.dot_dimension_numbers<[1], [0], [0], [1], [0, 0, 1, 1], [], []>} : vector<128x96xbf16>, vector<96x32xbf16>, vector<128x32xf32> -> vector<128x32xf32>
    %107 = arith.addf %92, %106 : vector<128x32xf32>
    %c47 = arith.constant 47 : index
    %c0_48 = arith.constant 0 : index
    %108 = vector.load %arg10[%c47, %c0_48] : memref<192x32xbf16, #tpu.memory_space<vmem>>, vector<128x32xbf16>
    %c48 = arith.constant 48 : index
    %c0_49 = arith.constant 0 : index
    %109 = vector.load %arg10[%c48, %c0_49] : memref<192x32xbf16, #tpu.memory_space<vmem>>, vector<128x32xbf16>
    %c49 = arith.constant 49 : index
    %c0_50 = arith.constant 0 : index
    %110 = vector.load %arg10[%c49, %c0_50] : memref<192x32xbf16, #tpu.memory_space<vmem>>, vector<128x32xbf16>
    %cst_51 = arith.constant 0.000000e+00 : bf16
    %111 = vector.broadcast %cst_51 : bf16 to vector<128x32xbf16>
    %112 = vector.shape_cast %60 : vector<128x1xi1> to vector<128x1xi1>
    %113 = vector.broadcast %112 : vector<128x1xi1> to vector<128x32xi1>
    %114 = arith.select %113, %108, %111 : vector<128x32xi1>, vector<128x32xbf16>
    %115 = vector.shape_cast %78 : vector<128x1xi1> to vector<128x1xi1>
    %116 = vector.broadcast %115 : vector<128x1xi1> to vector<128x32xi1>
    %117 = arith.select %116, %110, %111 : vector<128x32xi1>, vector<128x32xbf16>
    %118 = tpu.concatenate %114, %109, %117 in 1 : vector<128x32xbf16>, vector<128x32xbf16>, vector<128x32xbf16> -> vector<128x96xbf16>
    %c2 = arith.constant 2 : index
    %c0_52 = arith.constant 0 : index
    %c0_53 = arith.constant 0 : index
    %119 = vector.load %arg5[%c2, %c0_52, %c0_53] : memref<3x96x32xbf16, #tpu.memory_space<vmem>>, vector<1x96x32xbf16>
    %120 = vector.shape_cast %119 : vector<1x96x32xbf16> to vector<96x32xbf16>
    %cst_54 = arith.constant dense<0.000000e+00> : vector<128x32xf32>
    %121 = tpu.matmul %118, %120, %cst_54 {dimension_numbers = #tpu.dot_dimension_numbers<[1], [0], [0], [1], [0, 0, 1, 1], [], []>} : vector<128x96xbf16>, vector<96x32xbf16>, vector<128x32xf32> -> vector<128x32xf32>
    %122 = arith.addf %107, %121 : vector<128x32xf32>
    %c0_55 = arith.constant 0 : index
    %c0_56 = arith.constant 0 : index
    %123 = vector.load %arg6[%c0_55, %c0_56] : memref<1x32xf32, #tpu.memory_space<vmem>>, vector<1x32xf32>
    %124 = vector.broadcast %123 : vector<1x32xf32> to vector<128x32xf32>
    %125 = arith.addf %122, %124 : vector<128x32xf32>
    %cst_57 = arith.constant 0.000000e+00 : f32
    %126 = vector.broadcast %cst_57 : f32 to vector<128x32xf32>
    %127 = arith.maximumf %125, %126 : vector<128x32xf32>
    %128 = arith.truncf %127 : vector<128x32xf32> to vector<128x32xbf16>
    %c0_58 = arith.constant 0 : index
    %c0_59 = arith.constant 0 : index
    %129 = vector.load %arg7[%c0_58, %c0_59] : memref<32x128xbf16, #tpu.memory_space<vmem>>, vector<32x128xbf16>
    %cst_60 = arith.constant dense<0.000000e+00> : vector<128x128xf32>
    %130 = tpu.matmul %128, %129, %cst_60 {dimension_numbers = #tpu.dot_dimension_numbers<[1], [0], [0], [1], [0, 0, 1, 1], [], []>} : vector<128x32xbf16>, vector<32x128xbf16>, vector<128x128xf32> -> vector<128x128xf32>
    %131 = vector.shape_cast %11 : vector<8x16x128xbf16> to vector<128x128xbf16>
    %132 = arith.extf %131 : vector<128x128xbf16> to vector<128x128xf32>
    %c0_61 = arith.constant 0 : index
    %c0_62 = arith.constant 0 : index
    %133 = vector.load %arg8[%c0_61, %c0_62] : memref<1x128xf32, #tpu.memory_space<vmem>>, vector<1x128xf32>
    %134 = vector.broadcast %133 : vector<1x128xf32> to vector<128x128xf32>
    %135 = arith.addf %130, %134 : vector<128x128xf32>
    %136 = arith.addf %135, %132 : vector<128x128xf32>
    %cst_63 = arith.constant 0.000000e+00 : f32
    %137 = vector.broadcast %cst_63 : f32 to vector<128x128xf32>
    %138 = arith.maximumf %136, %137 : vector<128x128xf32>
    %139 = vector.shape_cast %138 : vector<128x128xf32> to vector<8x16x128xf32>
    %140 = arith.truncf %139 : vector<8x16x128xf32> to vector<8x16x128xbf16>
    %c0_64 = arith.constant 0 : index
    %c0_65 = arith.constant 0 : index
    %c0_66 = arith.constant 0 : index
    %c0_67 = arith.constant 0 : index
    %141 = vector.load %arg9[%c0_64, %c0_65, %c0_66, %c0_67] : memref<1x8x16x128xbf16, #tpu.memory_space<vmem>>, vector<1x8x16x128xbf16>
    %142 = vector.shape_cast %141 : vector<1x8x16x128xbf16> to vector<8x16x128xbf16>
    %143 = vector.shape_cast %140 : vector<8x16x128xbf16> to vector<1x8x16x128xbf16>
    tpu.vector_store %arg9[%c0_64, %c0_65, %c0_66, %c0_67], %143 {strides = array<i32>} : memref<1x8x16x128xbf16, #tpu.memory_space<vmem>>, vector<1x8x16x128xbf16>,
    return
  }
  func.func @transform_0(%arg0: i32, %arg1: i32) -> (i32, i32, i32, i32) {
    %c0_i32 = arith.constant 0 : i32
    %c0_i32_0 = arith.constant 0 : i32
    %c0_i32_1 = arith.constant 0 : i32
    %c0_i32_2 = arith.constant 0 : i32
    return %arg0, %c0_i32, %c0_i32_0, %c0_i32_1 : i32, i32, i32, i32
  }
  func.func @transform_1(%arg0: i32, %arg1: i32) -> (i32, i32) {
    %c0_i32 = arith.constant 0 : i32
    %c0_i32_0 = arith.constant 0 : i32
    %c0_i32_1 = arith.constant 0 : i32
    return %c0_i32, %c0_i32_0 : i32, i32
  }
  func.func @transform_2(%arg0: i32, %arg1: i32) -> (i32, i32) {
    %c0_i32 = arith.constant 0 : i32
    %c0_i32_0 = arith.constant 0 : i32
    %c0_i32_1 = arith.constant 0 : i32
    return %c0_i32, %c0_i32_0 : i32, i32
  }
  func.func @transform_3(%arg0: i32, %arg1: i32) -> (i32, i32, i32) {
    %c0_i32 = arith.constant 0 : i32
    %c0_i32_0 = arith.constant 0 : i32
    %c0_i32_1 = arith.constant 0 : i32
    %c0_i32_2 = arith.constant 0 : i32
    return %c0_i32, %c0_i32_0, %c0_i32_1 : i32, i32, i32
  }
  func.func @transform_4(%arg0: i32, %arg1: i32) -> (i32, i32) {
    %c0_i32 = arith.constant 0 : i32
    %c0_i32_0 = arith.constant 0 : i32
    %c0_i32_1 = arith.constant 0 : i32
    return %c0_i32, %c0_i32_0 : i32, i32
  }
  func.func @transform_5(%arg0: i32, %arg1: i32) -> (i32, i32) {
    %c0_i32 = arith.constant 0 : i32
    %c0_i32_0 = arith.constant 0 : i32
    %c0_i32_1 = arith.constant 0 : i32
    return %c0_i32, %c0_i32_0 : i32, i32
  }
  func.func @transform_6(%arg0: i32, %arg1: i32) -> (i32, i32) {
    %c0_i32 = arith.constant 0 : i32
    %c0_i32_0 = arith.constant 0 : i32
    %c0_i32_1 = arith.constant 0 : i32
    return %c0_i32, %c0_i32_0 : i32, i32
  }
  func.func @transform_7(%arg0: i32, %arg1: i32) -> (i32, i32, i32, i32) {
    %c0_i32 = arith.constant 0 : i32
    %c0_i32_0 = arith.constant 0 : i32
    %c0_i32_1 = arith.constant 0 : i32
    return %arg0, %arg1, %c0_i32, %c0_i32_0 : i32, i32, i32, i32
  }
}

</mosaic_0001>

<llo_original>
// kernel: bottleneck_forward.1
$region0: #{bottleneck_forward.1}
  #allocation0 [shape = 'u32[]', space=smem, size = 0x4, offset = 0x4, fixed_abs, tag = 'smem constant byte address 0x4 - core index']
  #allocation1 [shape = 'u32[144,128]{1,0:T(1,128)}', space=vmem, size = 0x12000, scoped, tag = 'internal scratch']
  #allocation2 [shape = 'bf16[192,32]{1,0:T(16,128)(2,1)}', space=vmem, size = 0xc000, scoped, tag = 'scratch operand']
  %s0 = inlined_call_operand.vmem [shape: bf16[2,16,16,128], index: 0, kind: input, shape index: {}]
  %s1 = inlined_call_operand.vmem [shape: bf16[128,32], index: 1, kind: input, shape index: {}]
  %s2 = inlined_call_operand.vmem [shape: f32[1,32], index: 2, kind: input, shape index: {}]
  %s3 = inlined_call_operand.vmem [shape: bf16[3,96,32], index: 3, kind: input, shape index: {}]
  %s4 = inlined_call_operand.vmem [shape: f32[1,32], index: 4, kind: input, shape index: {}]
  %s5 = inlined_call_operand.vmem [shape: bf16[32,128], index: 5, kind: input, shape index: {}]
  %s6 = inlined_call_operand.vmem [shape: f32[1,128], index: 6, kind: input, shape index: {}]
  %s7 = inlined_call_operand.hbm [shape: bf16[2,16,16,128], index: 7, kind: output, shape index: {}]
  %s8 = sld [smem:[#allocation0]]
  $region61: #{bottleneck_forward.1} parent=0
    _
  %s10 = ssub.s32 1, %s8
  %s11 = scalar_select 0, %s10, %s8
  $region1: #{bottleneck_forward.1} parent=0
    #allocation3 [shape = 'u8[65536]{0}', space=vmem, size = 0x10000, scoped, tag = 'output window, operand 0']
    #allocation4 [shape = 's32[2]{0}', space=sflag, size = 0x8, scoped, tag = 'scoped memory for bottleneck_forward.1']
    %12 = vsyncpa [#allocation4], 0
    %s13 = scalar_lea.sflag [#allocation4], 1
    %14 = vsyncpa %s13, 0
    loop: start=0, step=1, limit=6
    $region2: #{bottleneck_forward.1} parent=1 // loop_pre_header
      _
    $region3: #{bottleneck_forward.1} parent=1 // loop_header
      %s16 = sphi 0, %s20
      %p17 = scmp.ge.s32.totalorder %s16, 6
      %s23 = sphi 0, %s35
      %s24 = sphi 0, %s31
      %s25 = sphi 0, %s23
      %s26 = sphi 0, %s24
      %s27 = sphi 0, %s25
      %s28 = sphi 0, %s26
      %s38 = sphi 0, %s40
      %s41 = sphi 0, %s38
      %s42 = sphi 0, %s41
      %s58 = sphi 0, %s42
      %s62 = sphi 0, %s62
      %s64 = sphi 0, %s62
      %s65 = sphi 0, %s64
      %s79 = sphi 0, %s65
      %s83 = sphi 0, %s83
      %s85 = sphi 0, %s83
      %s86 = sphi 0, %s85
      %s100 = sphi 0, %s86
      %s104 = sphi 0, %s104
      %s106 = sphi 0, %s104
      %s107 = sphi 0, %s106
      %s121 = sphi 0, %s107
      %s125 = sphi 0, %s125
      %s127 = sphi 0, %s125
      %s128 = sphi 0, %s127
      %s142 = sphi 0, %s128
      %s146 = sphi 0, %s146
      %s148 = sphi 0, %s146
      %s149 = sphi 0, %s148
      %s163 = sphi 0, %s149
      %s167 = sphi 0, %s167
      %s169 = sphi 0, %s167
      %s170 = sphi 0, %s169
      %s184 = sphi 0, %s170
      %s192 = sphi 0, %s194
      %s195 = sphi 0, %s192
      %s196 = sphi 0, %s195
      %s212 = sphi 0, %s196
    $region4: #{bottleneck_forward.1} parent=1 // loop_header_branch
      %19 = sbr.rel (%p17) target = $region8
    $region5: #{bottleneck_forward.1} parent=1 // loop_body
      %s21 = ssub.s32 %s16, 1
      %s22 = ssub.s32 %s16, 2
      %s29 = sadd.s32 1, %s24
      %p30 = scmp.ge.s32.totalorder %s29, 2
      %s31 = scalar_select %p30, 0, %s29
      %s32 = sadd.s32 1, %s23
      %s33 = scalar_select %p30, %s32, %s23
      %p34 = scmp.ge.s32.totalorder %s33, 2
      %s35 = scalar_select %p34, 0, %s33
      %s36 = ssub.s32 %s23, %s35
      %p37 = scmp.eq.s32.totalorder %s36, 0
      %s39 = sadd.s32 %s38, 1
      %s40 = scalar_select %p37, %s38, %s39
      %p43 = pneg %p37
      %p44 = scmp.eq.s32.totalorder %s16, 3
      %p45 = por %p43, %p44
      %p46 = scmp.ne.s32.totalorder %s38, %s41
      %p47 = scmp.eq.s32.totalorder %s16, 0
      %p48 = por %p46, %p47
      %p49 = scmp.ne.s32.totalorder %s38, %s41
      %p50 = scmp.eq.s32.totalorder %s21, 3
      %p51 = por %p49, %p50
      %p52 = scmp.ne.s32.totalorder %s41, %s42
      %p53 = scmp.eq.s32.totalorder %s21, 0
      %p54 = por %p52, %p53
      %p55 = scmp.ne.s32.totalorder %s41, %s42
      %p56 = scmp.eq.s32.totalorder %s22, 3
      %p57 = por %p55, %p56
      %p59 = scmp.ne.s32.totalorder %s42, %s58
      %p60 = scmp.eq.s32.totalorder %s22, 0
      %p61 = por %p59, %p60
      %s63 = sadd.s32 %s62, 1
      %p66 = scmp.eq.s32.totalorder %s16, 3
      %p67 = scmp.ne.s32.totalorder %s62, %s64
      %p68 = scmp.eq.s32.totalorder %s16, 0
      %p69 = por %p67, %p68
      %p70 = scmp.ne.s32.totalorder %s62, %s64
      %p71 = scmp.eq.s32.totalorder %s21, 3
      %p72 = por %p70, %p71
      %p73 = scmp.ne.s32.totalorder %s64, %s65
      %p74 = scmp.eq.s32.totalorder %s21, 0
      %p75 = por %p73, %p74
      %p76 = scmp.ne.s32.totalorder %s64, %s65
      %p77 = scmp.eq.s32.totalorder %s22, 3
      %p78 = por %p76, %p77
      %p80 = scmp.ne.s32.totalorder %s65, %s79
      %p81 = scmp.eq.s32.totalorder %s22, 0
      %p82 = por %p80, %p81
      %s84 = sadd.s32 %s83, 1
      %p87 = scmp.eq.s32.totalorder %s16, 3
      %p88 = scmp.ne.s32.totalorder %s83, %s85
      %p89 = scmp.eq.s32.totalorder %s16, 0
      %p90 = por %p88, %p89
      %p91 = scmp.ne.s32.totalorder %s83, %s85
      %p92 = scmp.eq.s32.totalorder %s21, 3
      %p93 = por %p91, %p92
      %p94 = scmp.ne.s32.totalorder %s85, %s86
      %p95 = scmp.eq.s32.totalorder %s21, 0
      %p96 = por %p94, %p95
      %p97 = scmp.ne.s32.totalorder %s85, %s86
      %p98 = scmp.eq.s32.totalorder %s22, 3
      %p99 = por %p97, %p98
      %p101 = scmp.ne.s32.totalorder %s86, %s100
      %p102 = scmp.eq.s32.totalorder %s22, 0
      %p103 = por %p101, %p102
      %s105 = sadd.s32 %s104, 1
      %p108 = scmp.eq.s32.totalorder %s16, 3
      %p109 = scmp.ne.s32.totalorder %s104, %s106
      %p110 = scmp.eq.s32.totalorder %s16, 0
      %p111 = por %p109, %p110
      %p112 = scmp.ne.s32.totalorder %s104, %s106
      %p113 = scmp.eq.s32.totalorder %s21, 3
      %p114 = por %p112, %p113
      %p115 = scmp.ne.s32.totalorder %s106, %s107
      %p116 = scmp.eq.s32.totalorder %s21, 0
      %p117 = por %p115, %p116
      %p118 = scmp.ne.s32.totalorder %s106, %s107
      %p119 = scmp.eq.s32.totalorder %s22, 3
      %p120 = por %p118, %p119
      %p122 = scmp.ne.s32.totalorder %s107, %s121
      %p123 = scmp.eq.s32.totalorder %s22, 0
      %p124 = por %p122, %p123
      %s126 = sadd.s32 %s125, 1
      %p129 = scmp.eq.s32.totalorder %s16, 3
      %p130 = scmp.ne.s32.totalorder %s125, %s127
      %p131 = scmp.eq.s32.totalorder %s16, 0
      %p132 = por %p130, %p131
      %p133 = scmp.ne.s32.totalorder %s125, %s127
      %p134 = scmp.eq.s32.totalorder %s21, 3
      %p135 = por %p133, %p134
      %p136 = scmp.ne.s32.totalorder %s127, %s128
      %p137 = scmp.eq.s32.totalorder %s21, 0
      %p138 = por %p136, %p137
      %p139 = scmp.ne.s32.totalorder %s127, %s128
      %p140 = scmp.eq.s32.totalorder %s22, 3
      %p141 = por %p139, %p140
      %p143 = scmp.ne.s32.totalorder %s128, %s142
      %p144 = scmp.eq.s32.totalorder %s22, 0
      %p145 = por %p143, %p144
      %s147 = sadd.s32 %s146, 1
      %p150 = scmp.eq.s32.totalorder %s16, 3
      %p151 = scmp.ne.s32.totalorder %s146, %s148
      %p152 = scmp.eq.s32.totalorder %s16, 0
      %p153 = por %p151, %p152
      %p154 = scmp.ne.s32.totalorder %s146, %s148
      %p155 = scmp.eq.s32.totalorder %s21, 3
      %p156 = por %p154, %p155
      %p157 = scmp.ne.s32.totalorder %s148, %s149
      %p158 = scmp.eq.s32.totalorder %s21, 0
      %p159 = por %p157, %p158
      %p160 = scmp.ne.s32.totalorder %s148, %s149
      %p161 = scmp.eq.s32.totalorder %s22, 3
      %p162 = por %p160, %p161
      %p164 = scmp.ne.s32.totalorder %s149, %s163
      %p165 = scmp.eq.s32.totalorder %s22, 0
      %p166 = por %p164, %p165
      %s168 = sadd.s32 %s167, 1
      %p171 = scmp.eq.s32.totalorder %s16, 3
      %p172 = scmp.ne.s32.totalorder %s167, %s169
      %p173 = scmp.eq.s32.totalorder %s16, 0
      %p174 = por %p172, %p173
      %p175 = scmp.ne.s32.totalorder %s167, %s169
      %p176 = scmp.eq.s32.totalorder %s21, 3
      %p177 = por %p175, %p176
      %p178 = scmp.ne.s32.totalorder %s169, %s170
      %p179 = scmp.eq.s32.totalorder %s21, 0
      %p180 = por %p178, %p179
      %p181 = scmp.ne.s32.totalorder %s169, %s170
      %p182 = scmp.eq.s32.totalorder %s22, 3
      %p183 = por %p181, %p182
      %p185 = scmp.ne.s32.totalorder %s170, %s184
      %p186 = scmp.eq.s32.totalorder %s22, 0
      %p187 = por %p185, %p186
      %s188 = ssub.s32 %s23, %s35
      %s189 = ssub.s32 %s24, %s31
      %s190 = sor.u32 %s188, %s189
      %p191 = scmp.eq.s32.totalorder %s190, 0
      %s193 = sadd.s32 %s192, 1
      %s194 = scalar_select %p191, %s192, %s193
      %p197 = pneg %p191
      %p198 = scmp.eq.s32.totalorder %s16, 3
      %p199 = por %p197, %p198
      %p200 = scmp.ne.s32.totalorder %s192, %s195
      %p201 = scmp.eq.s32.totalorder %s16, 0
      %p202 = por %p200, %p201
      %p203 = scmp.ne.s32.totalorder %s192, %s195
      %p204 = scmp.eq.s32.totalorder %s21, 3
      %p205 = por %p203, %p204
      %p206 = scmp.ne.s32.totalorder %s195, %s196
      %p207 = scmp.eq.s32.totalorder %s21, 0
      %p208 = por %p206, %p207
      %p209 = scmp.ne.s32.totalorder %s195, %s196
      %p210 = scmp.eq.s32.totalorder %s22, 3
      %p211 = por %p209, %p210
      %p213 = scmp.ne.s32.totalorder %s196, %s212
      %p214 = scmp.eq.s32.totalorder %s22, 0
      %p215 = por %p213, %p214
      %p216 = scmp.le.s32.totalorder 1, %s16
      %p217 = scmp.lt.s32.totalorder %s16, 5
      %p218 = pnand %p216, %p217
      %p219 = pneg %p218
      // Predicated region
      $region9: #{bottleneck_forward.1} parent=5 // pred_check
        _
      $region10: #{bottleneck_forward.1} parent=5 // pred_check_branch
        %221 = sbr.rel (%p218) target = $region12
      $region11: #{bottleneck_forward.1} parent=5 // pred_region
        %s222 = ssub.s32 %s16, 1
        // Predicated region
        $region13: #{bottleneck_forward.1} parent=11 // pred_check
          %p223 = pneg %p75
        $region14: #{bottleneck_forward.1} parent=11 // pred_check_branch
          %225 = sbr.rel (%p223) target = $region16
        $region15: #{bottleneck_forward.1} parent=11 // pred_region
          _
        $region16: #{bottleneck_forward.1} parent=11 // pred_fallthru
          _
        // Predicated region
        $region17: #{bottleneck_forward.1} parent=11 // pred_check
          %p226 = pneg %p96
        $region18: #{bottleneck_forward.1} parent=11 // pred_check_branch
          %228 = sbr.rel (%p226) target = $region20
        $region19: #{bottleneck_forward.1} parent=11 // pred_region
          _
        $region20: #{bottleneck_forward.1} parent=11 // pred_fallthru
          _
        // Predicated region
        $region21: #{bottleneck_forward.1} parent=11 // pred_check
          %p229 = pneg %p117
        $region22: #{bottleneck_forward.1} parent=11 // pred_check_branch
          %231 = sbr.rel (%p229) target = $region24
        $region23: #{bottleneck_forward.1} parent=11 // pred_region
          _
        $region24: #{bottleneck_forward.1} parent=11 // pred_fallthru
          _
        // Predicated region
        $region25: #{bottleneck_forward.1} parent=11 // pred_check
          %p232 = pneg %p138
        $region26: #{bottleneck_forward.1} parent=11 // pred_check_branch
          %234 = sbr.rel (%p232) target = $region28
        $region27: #{bottleneck_forward.1} parent=11 // pred_region
          _
        $region28: #{bottleneck_forward.1} parent=11 // pred_fallthru
          _
        // Predicated region
        $region29: #{bottleneck_forward.1} parent=11 // pred_check
          %p235 = pneg %p159
        $region30: #{bottleneck_forward.1} parent=11 // pred_check_branch
          %237 = sbr.rel (%p235) target = $region32
        $region31: #{bottleneck_forward.1} parent=11 // pred_region
          _
        $region32: #{bottleneck_forward.1} parent=11 // pred_fallthru
          _
        // Predicated region
        $region33: #{bottleneck_forward.1} parent=11 // pred_check
          %p238 = pneg %p180
        $region34: #{bottleneck_forward.1} parent=11 // pred_check_branch
          %240 = sbr.rel (%p238) target = $region36
        $region35: #{bottleneck_forward.1} parent=11 // pred_region
          _
        $region36: #{bottleneck_forward.1} parent=11 // pred_fallthru
          _
      $region12: #{bottleneck_forward.1} parent=5 // pred_fallthru
        _
      %p241 = scmp.lt.s32.totalorder %s16, 4
      // Predicated region
      $region37: #{bottleneck_forward.1} parent=5 // pred_check
        %p242 = pneg %p241
      $region38: #{bottleneck_forward.1} parent=5 // pred_check_branch
        %244 = sbr.rel (%p242) target = $region40
      $region39: #{bottleneck_forward.1} parent=5 // pred_region
        // Predicated region
        $region41: #{bottleneck_forward.1} parent=39 // pred_check
          %p245 = pneg %p48
        $region42: #{bottleneck_forward.1} parent=39 // pred_check_branch
          %247 = sbr.rel (%p245) target = $region44
        $region43: #{bottleneck_forward.1} parent=39 // pred_region
          %p248 = scmp.lt.s32.totalorder %s23, 1
          %s249 = scalar_select %p248, %s23, 1
          %s250 = smul.addr %s249, 32
          %s251 = smul.addr %s250, 4
          %s252 = scalar_lea.vmem %s0, %s251
        $region44: #{bottleneck_forward.1} parent=39 // pred_fallthru
          _
      $region40: #{bottleneck_forward.1} parent=5 // pred_fallthru
        _
      %p253 = scmp.le.s32.totalorder 1, %s16
      %p254 = scmp.lt.s32.totalorder %s16, 5
      %p255 = pnand %p253, %p254
      %p256 = pneg %p255
      // Predicated region
      $region45: #{bottleneck_forward.1} parent=5 // pred_check
        _
      $region46: #{bottleneck_forward.1} parent=5 // pred_check_branch
        %258 = sbr.rel (%p255) target = $region48
      $region47: #{bottleneck_forward.1} parent=5 // pred_region
        %s259 = ssub.s32 %s16, 1
        %p260 = scmp.lt.s32.totalorder %s25, 1
        %s261 = scalar_select %p260, %s25, 1
        %s262 = smul.addr %s261, 32
        %s263 = smul.addr %s262, 4
        %s264 = scalar_lea.vmem %s0, %s263
        %p265 = pneg %p54
        %p266 = pneg %p51
        %p267 = pneg %p75
        %p268 = pneg %p72
        %p269 = pneg %p96
        %p270 = pneg %p93
        %p271 = pneg %p117
        %p272 = pneg %p114
        %p273 = pneg %p138
        %p274 = pneg %p135
        %p275 = pneg %p159
        %p276 = pneg %p156
        %p277 = pneg %p180
        %p278 = pneg %p177
        %p279 = pneg %p208
        %p280 = pneg %p205
        %s281 = sand.u32 %s195, 1
        %s282 = scalar_lea.sflag [#allocation4], %s281
        %s283 = sand.u32 %s195, 1
        %s284 = smul.addr %s283, 64
        %s285 = scalar_lea.vmem [#allocation3], %s284
        %p286 = scmp.lt.s32.totalorder %s25, 1
        %s287 = scalar_select %p286, %s25, 1
        %s288 = smul.addr %s287, 32
        %s289 = smul.addr %s288, 4
        %s290 = scalar_lea.vmem %s0, %s289
        %s291 = smul.u32 8, %s26
        %s295 = smul.u32 %s26, 8
        %s296 = ssub.s32 %s295, 1
        %p297 = scmp.gt.s32.totalorder %s296, 0
        %s298 = scalar_select %p297, %s296, 0
        %s299 = sadd.s32 %s295, 8
        %p300 = scmp.lt.s32.totalorder %s299, 15
        %s301 = scalar_select %p300, %s299, 15
        %s302 = smul.u32 %s298, 2
        %s303 = smul.addr %s302, 4
        %s304 = scalar_lea.vmem %s290, %s303
        %v305 = vld [vmem:[%s304] sm:$0xf]
        %v306 = vld [vmem:[%s304 + $0x4] sm:$0xf]
        %s307 = smul.u32 %s295, 2
        %s308 = smul.addr %s307, 4
        %s309 = scalar_lea.vmem %s290, %s308
        %v310 = vld [vmem:[%s309] sm:$0xf]
        %v311 = vld [vmem:[%s309 + $0x4] sm:$0xf]
        %v312 = vld [vmem:[%s309 + $0x8] sm:$0xf]
        %v313 = vld [vmem:[%s309 + $0xc] sm:$0xf]
        %v314 = vld [vmem:[%s309 + $0x10] sm:$0xf]
        %v315 = vld [vmem:[%s309 + $0x14] sm:$0xf]
        %v316 = vld [vmem:[%s309 + $0x18] sm:$0xf]
        %v317 = vld [vmem:[%s309 + $0x1c] sm:$0xf]
        %v318 = vld [vmem:[%s309 + $0x20] sm:$0xf]
        %v319 = vld [vmem:[%s309 + $0x24] sm:$0xf]
        %v320 = vld [vmem:[%s309 + $0x28] sm:$0xf]
        %v321 = vld [vmem:[%s309 + $0x2c] sm:$0xf]
        %v322 = vld [vmem:[%s309 + $0x30] sm:$0xf]
        %v323 = vld [vmem:[%s309 + $0x34] sm:$0xf]
        %v324 = vld [vmem:[%s309 + $0x38] sm:$0xf]
        %v325 = vld [vmem:[%s309 + $0x3c] sm:$0xf]
        %s326 = smul.u32 %s301, 2
        %s327 = smul.addr %s326, 4
        %s328 = scalar_lea.vmem %s290, %s327
        %v329 = vld [vmem:[%s328] sm:$0xf]
        %v330 = vld [vmem:[%s328 + $0x4] sm:$0xf]
        %v331 = vld [vmem:[%s1] sm:$0xf]
        %v332 = vld [vmem:[%s1 + $0x4] sm:$0xf]
        %v333 = vld [vmem:[%s1 + $0x8] sm:$0xf]
        %v334 = vld [vmem:[%s1 + $0xc] sm:$0xf]
        %v335 = vld [vmem:[%s1 + $0x10] sm:$0xf]
        %v336 = vld [vmem:[%s1 + $0x14] sm:$0xf]
        %v337 = vld [vmem:[%s1 + $0x18] sm:$0xf]
        %v338 = vld [vmem:[%s1 + $0x1c] sm:$0xf]
        %v339 = vld [vmem:[%s1 + $0x20] sm:$0xf]
        %v340 = vld [vmem:[%s1 + $0x24] sm:$0xf]
        %v341 = vld [vmem:[%s1 + $0x28] sm:$0xf]
        %v342 = vld [vmem:[%s1 + $0x2c] sm:$0xf]
        %v343 = vld [vmem:[%s1 + $0x30] sm:$0xf]
        %v344 = vld [vmem:[%s1 + $0x34] sm:$0xf]
        %v345 = vld [vmem:[%s1 + $0x38] sm:$0xf]
        %v346 = vld [vmem:[%s1 + $0x3c] sm:$0xf]
        %v347 = vld [vmem:[%s2] sm:$0x1]
        %v349 = vlaneseq
        %v350 = vshrl.u32 %v349, 7
        %v351 = vsub.s32 0, %v350
        %v352 = vrot.slane %v347, %v351
        %v374 = vunpack.c.l.b16 %v305
        %v375 = vunpack.c.l.b16 %v306
        %v376 = vunpack.c.l.b16 %v310
        %v377 = vunpack.c.l.b16 %v311
        %v378 = vunpack.c.l.b16 %v312
        %v379 = vunpack.c.l.b16 %v313
        %v380 = vunpack.c.l.b16 %v314
        %v381 = vunpack.c.l.b16 %v315
        %v382 = vunpack.c.l.b16 %v316
        %v383 = vunpack.c.l.b16 %v317
        %v384 = vunpack.c.l.b16 %v318
        %v385 = vunpack.c.l.b16 %v319
        %v386 = vunpack.c.l.b16 %v320
        %v387 = vunpack.c.l.b16 %v321
        %v388 = vunpack.c.l.b16 %v322
        %v389 = vunpack.c.l.b16 %v323
        %v390 = vunpack.c.l.b16 %v324
        %v391 = vunpack.c.l.b16 %v325
        %v392 = vunpack.c.l.b16 %v329
        %v393 = vunpack.c.l.b16 %v330
        %v394 = vpack.c.b16 %v375, %v374
        %v395 = vpack.c.b16 %v377, %v376
        %v396 = vpack.c.b16 %v379, %v378
        %v397 = vpack.c.b16 %v381, %v380
        %v398 = vpack.c.b16 %v383, %v382
        %v399 = vpack.c.b16 %v385, %v384
        %v400 = vpack.c.b16 %v387, %v386
        %v401 = vpack.c.b16 %v389, %v388
        %v402 = vpack.c.b16 %v391, %v390
        %v403 = vpack.c.b16 %v393, %v392
        %v430 = vunpack.c.l.b16 %v331
        %v431 = vunpack.c.l.b16 %v332
        %v432 = vunpack.c.l.b16 %v333
        %v433 = vunpack.c.l.b16 %v334
        %v434 = vunpack.c.l.b16 %v335
        %v435 = vunpack.c.l.b16 %v336
        %v436 = vunpack.c.l.b16 %v337
        %v437 = vunpack.c.l.b16 %v338
        %v438 = vunpack.c.l.b16 %v339
        %v439 = vunpack.c.l.b16 %v340
        %v440 = vunpack.c.l.b16 %v341
        %v441 = vunpack.c.l.b16 %v342
        %v442 = vunpack.c.l.b16 %v343
        %v443 = vunpack.c.l.b16 %v344
        %v444 = vunpack.c.l.b16 %v345
        %v445 = vunpack.c.l.b16 %v346
        %v446 = vpack.c.b16 %v431, %v430
        %v447 = vpack.c.b16 %v433, %v432
        %v448 = vpack.c.b16 %v435, %v434
        %v449 = vpack.c.b16 %v437, %v436
        %v450 = vpack.c.b16 %v439, %v438
        %v451 = vpack.c.b16 %v441, %v440
        %v452 = vpack.c.b16 %v443, %v442
        %v453 = vpack.c.b16 %v445, %v444
        %462 = vmatprep.subr.bf16.mxu0 0
        %463 = vmatpush1.bf16.msra.mxu0 %v446
        %464 = vmatprep.subr.bf16.mxu0 0
        %465 = vmatpush1.bf16.msra.mxu0 %v447
        %466 = vmatprep.subr.bf16.mxu0 0
        %467 = vmatpush1.bf16.msra.mxu0 %v448
        %468 = vmatprep.subr.bf16.mxu0 0
        %469 = vmatpush1.bf16.msra.mxu0 %v449
        %470 = vmatprep.subr.bf16.mxu0 0
        %471 = vmatpush1.bf16.msra.mxu0 %v450
        %472 = vmatprep.subr.bf16.mxu0 0
        %473 = vmatpush1.bf16.msra.mxu0 %v451
        %474 = vmatprep.subr.bf16.mxu0 0
        %475 = vmatpush1.bf16.msra.mxu0 %v452
        %476 = vmatprep.subr.bf16.mxu0 0
        %477 = vmatpush1.bf16.msra.mxu0 %v453
        %478 = vmatprep.subr.bf16.mxu0 0
        %479 = vmatpush1.bf16.msra.mxu0 0
        %480 = vmatprep.subr.bf16.mxu0 0
        %481 = vmatpush1.bf16.msra.mxu0 0
        %482 = vmatprep.subr.bf16.mxu0 0
        %483 = vmatpush1.bf16.msra.mxu0 0
        %484 = vmatprep.subr.bf16.mxu0 0
        %485 = vmatpush1.bf16.msra.mxu0 0
        %486 = vmatprep.subr.bf16.mxu0 0
        %487 = vmatpush1.bf16.msra.mxu0 0
        %488 = vmatprep.subr.bf16.mxu0 0
        %489 = vmatpush1.bf16.msra.mxu0 0
        %490 = vmatprep.subr.bf16.mxu0 0
        %491 = vmatpush1.bf16.msra.mxu0 0
        %492 = vmatprep.subr.bf16.mxu0 0
        %493 = vmatpush1.bf16.msra.mxu0 0
        %494 = vmatprep.mubr.bf16.mxu0 0
        %495 = vmatmul.mubr.bf16.gmra.mrb[0].mxu0 %v394
        %v496 = vpop.f32.mrb[0].mxu0
        %v497 = vadd.f32 %v352, %v496
        %v498 = vpop.f32.mrb[0].mxu0
        %v499 = vpop.f32.mrb[0].mxu0
        %v500 = vadd.f32 %v352, %v499
        %v501 = vpop.f32.mrb[0].mxu0
        %502 = vmatprep.mubr.bf16.mxu0 0
        %503 = vmatmul.mubr.bf16.gmra.mrb[0].mxu0 %v395
        %v504 = vpop.f32.mrb[0].mxu0
        %v505 = vadd.f32 %v352, %v504
        %v506 = vpop.f32.mrb[0].mxu0
        %v507 = vpop.f32.mrb[0].mxu0
        %v508 = vadd.f32 %v352, %v507
        %v509 = vpop.f32.mrb[0].mxu0
        %510 = vmatprep.mubr.bf16.mxu0 0
        %511 = vmatmul.mubr.bf16.gmra.mrb[0].mxu0 %v396
        %v512 = vpop.f32.mrb[0].mxu0
        %v513 = vadd.f32 %v352, %v512
        %v514 = vpop.f32.mrb[0].mxu0
        %v515 = vpop.f32.mrb[0].mxu0
        %v516 = vadd.f32 %v352, %v515
        %v517 = vpop.f32.mrb[0].mxu0
        %518 = vmatprep.mubr.bf16.mxu0 0
        %519 = vmatmul.mubr.bf16.gmra.mrb[0].mxu0 %v397
        %v520 = vpop.f32.mrb[0].mxu0
        %v521 = vadd.f32 %v352, %v520
        %v522 = vpop.f32.mrb[0].mxu0
        %v523 = vpop.f32.mrb[0].mxu0
        %v524 = vadd.f32 %v352, %v523
        %v525 = vpop.f32.mrb[0].mxu0
        %526 = vmatprep.mubr.bf16.mxu0 0
        %527 = vmatmul.mubr.bf16.gmra.mrb[0].mxu0 %v398
        %v528 = vpop.f32.mrb[0].mxu0
        %v529 = vadd.f32 %v352, %v528
        %v530 = vpop.f32.mrb[0].mxu0
        %v531 = vpop.f32.mrb[0].mxu0
        %v532 = vadd.f32 %v352, %v531
        %v533 = vpop.f32.mrb[0].mxu0
        %534 = vmatprep.mubr.bf16.mxu0 0
        %535 = vmatmul.mubr.bf16.gmra.mrb[0].mxu0 %v399
        %v536 = vpop.f32.mrb[0].mxu0
        %v537 = vadd.f32 %v352, %v536
        %v538 = vpop.f32.mrb[0].mxu0
        %v539 = vpop.f32.mrb[0].mxu0
        %v540 = vadd.f32 %v352, %v539
        %v541 = vpop.f32.mrb[0].mxu0
        %542 = vmatprep.mubr.bf16.mxu0 0
        %543 = vmatmul.mubr.bf16.gmra.mrb[0].mxu0 %v400
        %v544 = vpop.f32.mrb[0].mxu0
        %v545 = vadd.f32 %v352, %v544
        %v546 = vpop.f32.mrb[0].mxu0
        %v547 = vpop.f32.mrb[0].mxu0
        %v548 = vadd.f32 %v352, %v547
        %v549 = vpop.f32.mrb[0].mxu0
        %550 = vmatprep.mubr.bf16.mxu0 0
        %551 = vmatmul.mubr.bf16.gmra.mrb[0].mxu0 %v401
        %v552 = vpop.f32.mrb[0].mxu0
        %v553 = vadd.f32 %v352, %v552
        %v554 = vpop.f32.mrb[0].mxu0
        %v555 = vpop.f32.mrb[0].mxu0
        %v556 = vadd.f32 %v352, %v555
        %v557 = vpop.f32.mrb[0].mxu0
        %558 = vmatprep.mubr.bf16.mxu0 0
        %559 = vmatmul.mubr.bf16.gmra.mrb[0].mxu0 %v402
        %v560 = vpop.f32.mrb[0].mxu0
        %v561 = vadd.f32 %v352, %v560
        %v562 = vpop.f32.mrb[0].mxu0
        %v563 = vpop.f32.mrb[0].mxu0
        %v564 = vadd.f32 %v352, %v563
        %v565 = vpop.f32.mrb[0].mxu0
        %566 = vmatprep.mubr.bf16.mxu0 0
        %567 = vmatmul.mubr.bf16.gmra.mrb[0].mxu0 %v403
        %v568 = vpop.f32.mrb[0].mxu0
        %v569 = vadd.f32 %v352, %v568
        %v570 = vpop.f32.mrb[0].mxu0
        %v571 = vpop.f32.mrb[0].mxu0
        %v572 = vadd.f32 %v352, %v571
        %v573 = vpop.f32.mrb[0].mxu0
        %574 = vdwg.mxu0
        %v575 = vmax.f32 %v497, 0.0
        %v576 = vmax.f32 %v500, 0.0
        %v577 = vmax.f32 %v505, 0.0
        %v578 = vmax.f32 %v508, 0.0
        %v579 = vmax.f32 %v513, 0.0
        %v580 = vmax.f32 %v516, 0.0
        %v581 = vmax.f32 %v521, 0.0
        %v582 = vmax.f32 %v524, 0.0
        %v583 = vmax.f32 %v529, 0.0
        %v584 = vmax.f32 %v532, 0.0
        %v585 = vmax.f32 %v537, 0.0
        %v586 = vmax.f32 %v540, 0.0
        %v587 = vmax.f32 %v545, 0.0
        %v588 = vmax.f32 %v548, 0.0
        %v589 = vmax.f32 %v553, 0.0
        %v590 = vmax.f32 %v556, 0.0
        %v591 = vmax.f32 %v561, 0.0
        %v592 = vmax.f32 %v564, 0.0
        %v593 = vmax.f32 %v569, 0.0
        %v594 = vmax.f32 %v572, 0.0
        %v595 = vlaneseq
        %v596 = vshrl.u32 %v595, 7
        %v597 = vadd.s32 %v596, 8
        %v598 = vadd.s32 %v596, 16
        %v599 = vadd.s32 %v596, 24
        %v600 = vadd.s32 %v596, 32
        %v601 = vadd.s32 %v596, 40
        %v602 = vadd.s32 %v596, 48
        %v603 = vadd.s32 %v596, 56
        %v604 = vadd.s32 %v596, 64
        %v605 = vadd.s32 %v596, 72
        %v606 = vadd.s32 %v596, 80
        %v607 = vadd.s32 %v596, 88
        %v608 = vadd.s32 %v596, 96
        %v609 = vadd.s32 %v596, 104
        %v610 = vadd.s32 %v596, 112
        %v611 = vadd.s32 %v596, 120
        %v612 = vadd.s32 %v596, 128
        %v613 = vadd.s32 %v596, 136
        %v614 = vadd.s32 %v596, 144
        %v615 = vadd.s32 %v596, 152
        %p616 = scmp.gt.s32.totalorder %s26, 0
        %vm617 = vcmp.ge.s32.totalorder %v596, 16
        %vm618 = vcmp.ge.s32.totalorder %v597, 16
        %vm619 = vcmp.ge.s32.totalorder %v598, 16
        %vm620 = vcmp.ge.s32.totalorder %v599, 16
        %vm621 = vcmp.ge.s32.totalorder %v600, 16
        %vm622 = vcmp.ge.s32.totalorder %v601, 16
        %vm623 = vcmp.ge.s32.totalorder %v602, 16
        %vm624 = vcmp.ge.s32.totalorder %v603, 16
        %vm625 = vcmp.ge.s32.totalorder %v604, 16
        %vm626 = vcmp.ge.s32.totalorder %v605, 16
        %vm627 = vcmp.ge.s32.totalorder %v606, 16
        %vm628 = vcmp.ge.s32.totalorder %v607, 16
        %vm629 = vcmp.ge.s32.totalorder %v608, 16
        %vm630 = vcmp.ge.s32.totalorder %v609, 16
        %vm631 = vcmp.ge.s32.totalorder %v610, 16
        %vm632 = vcmp.ge.s32.totalorder %v611, 16
        %vm633 = vcmp.ge.s32.totalorder %v612, 16
        %vm634 = vcmp.ge.s32.totalorder %v613, 16
        %vm635 = vcmp.ge.s32.totalorder %v614, 16
        %vm636 = vcmp.ge.s32.totalorder %v615, 16
        %s637 = scalar_select %p616, 1, 0
        %v638 = vstv %s637
        %vm639 = vcmp.eq.s32.totalorder %v638, 1
        %vm640 = vmor %vm639, %vm617
        %vm641 = vmor %vm639, %vm618
        %vm642 = vmor %vm639, %vm619
        %vm643 = vmor %vm639, %vm620
        %vm644 = vmor %vm639, %vm621
        %vm645 = vmor %vm639, %vm622
        %vm646 = vmor %vm639, %vm623
        %vm647 = vmor %vm639, %vm624
        %vm648 = vmor %vm639, %vm625
        %vm649 = vmor %vm639, %vm626
        %vm650 = vmor %vm639, %vm627
        %vm651 = vmor %vm639, %vm628
        %vm652 = vmor %vm639, %vm629
        %vm653 = vmor %vm639, %vm630
        %vm654 = vmor %vm639, %vm631
        %vm655 = vmor %vm639, %vm632
        %vm656 = vmor %vm639, %vm633
        %vm657 = vmor %vm639, %vm634
        %vm658 = vmor %vm639, %vm635
        %vm659 = vmor %vm639, %vm636
        %p660 = scmp.lt.s32.totalorder %s26, 1
        %vm661 = vcmp.lt.s32.totalorder %v596, 144
        %vm662 = vcmp.lt.s32.totalorder %v597, 144
        %vm663 = vcmp.lt.s32.totalorder %v598, 144
        %vm664 = vcmp.lt.s32.totalorder %v599, 144
        %vm665 = vcmp.lt.s32.totalorder %v600, 144
        %vm666 = vcmp.lt.s32.totalorder %v601, 144
        %vm667 = vcmp.lt.s32.totalorder %v602, 144
        %vm668 = vcmp.lt.s32.totalorder %v603, 144
        %vm669 = vcmp.lt.s32.totalorder %v604, 144
        %vm670 = vcmp.lt.s32.totalorder %v605, 144
        %vm671 = vcmp.lt.s32.totalorder %v606, 144
        %vm672 = vcmp.lt.s32.totalorder %v607, 144
        %vm673 = vcmp.lt.s32.totalorder %v608, 144
        %vm674 = vcmp.lt.s32.totalorder %v609, 144
        %vm675 = vcmp.lt.s32.totalorder %v610, 144
        %vm676 = vcmp.lt.s32.totalorder %v611, 144
        %vm677 = vcmp.lt.s32.totalorder %v612, 144
        %vm678 = vcmp.lt.s32.totalorder %v613, 144
        %vm679 = vcmp.lt.s32.totalorder %v614, 144
        %vm680 = vcmp.lt.s32.totalorder %v615, 144
        %s681 = scalar_select %p660, 1, 0
        %v682 = vstv %s681
        %vm683 = vcmp.eq.s32.totalorder %v682, 1
        %vm684 = vmor %vm683, %vm661
        %vm685 = vmor %vm683, %vm662
        %vm686 = vmor %vm683, %vm663
        %vm687 = vmor %vm683, %vm664
        %vm688 = vmor %vm683, %vm665
        %vm689 = vmor %vm683, %vm666
        %vm690 = vmor %vm683, %vm667
        %vm691 = vmor %vm683, %vm668
        %vm692 = vmor %vm683, %vm669
        %vm693 = vmor %vm683, %vm670
        %vm694 = vmor %vm683, %vm671
        %vm695 = vmor %vm683, %vm672
        %vm696 = vmor %vm683, %vm673
        %vm697 = vmor %vm683, %vm674
        %vm698 = vmor %vm683, %vm675
        %vm699 = vmor %vm683, %vm676
        %vm700 = vmor %vm683, %vm677
        %vm701 = vmor %vm683, %vm678
        %vm702 = vmor %vm683, %vm679
        %vm703 = vmor %vm683, %vm680
        %vm704 = vmand %vm640, %vm684
        %vm705 = vmand %vm641, %vm685
        %vm706 = vmand %vm642, %vm686
        %vm707 = vmand %vm643, %vm687
        %vm708 = vmand %vm644, %vm688
        %vm709 = vmand %vm645, %vm689
        %vm710 = vmand %vm646, %vm690
        %vm711 = vmand %vm647, %vm691
        %vm712 = vmand %vm648, %vm692
        %vm713 = vmand %vm649, %vm693
        %vm714 = vmand %vm650, %vm694
        %vm715 = vmand %vm651, %vm695
        %vm716 = vmand %vm652, %vm696
        %vm717 = vmand %vm653, %vm697
        %vm718 = vmand %vm654, %vm698
        %vm719 = vmand %vm655, %vm699
        %vm720 = vmand %vm656, %vm700
        %vm721 = vmand %vm657, %vm701
        %vm722 = vmand %vm658, %vm702
        %vm723 = vmand %vm659, %vm703
        %v724 = vsel %vm704, 1, 0
        %v725 = vsel %vm705, 1, 0
        %v726 = vsel %vm706, 1, 0
        %v727 = vsel %vm707, 1, 0
        %v728 = vsel %vm708, 1, 0
        %v729 = vsel %vm709, 1, 0
        %v730 = vsel %vm710, 1, 0
        %v731 = vsel %vm711, 1, 0
        %v732 = vsel %vm712, 1, 0
        %v733 = vsel %vm713, 1, 0
        %v734 = vsel %vm714, 1, 0
        %v735 = vsel %vm715, 1, 0
        %v736 = vsel %vm716, 1, 0
        %v737 = vsel %vm717, 1, 0
        %v738 = vsel %vm718, 1, 0
        %v739 = vsel %vm719, 1, 0
        %v740 = vsel %vm720, 1, 0
        %v741 = vsel %vm721, 1, 0
        %v742 = vsel %vm722, 1, 0
        %v743 = vsel %vm723, 1, 0
        %vm744 = vcmp.eq.s32.totalorder %v724, 1
        %vm745 = vcmp.eq.s32.totalorder %v725, 1
        %vm746 = vcmp.eq.s32.totalorder %v726, 1
        %vm747 = vcmp.eq.s32.totalorder %v727, 1
        %vm748 = vcmp.eq.s32.totalorder %v728, 1
        %vm749 = vcmp.eq.s32.totalorder %v729, 1
        %vm750 = vcmp.eq.s32.totalorder %v730, 1
        %vm751 = vcmp.eq.s32.totalorder %v731, 1
        %vm752 = vcmp.eq.s32.totalorder %v732, 1
        %vm753 = vcmp.eq.s32.totalorder %v733, 1
        %vm754 = vcmp.eq.s32.totalorder %v734, 1
        %vm755 = vcmp.eq.s32.totalorder %v735, 1
        %vm756 = vcmp.eq.s32.totalorder %v736, 1
        %vm757 = vcmp.eq.s32.totalorder %v737, 1
        %vm758 = vcmp.eq.s32.totalorder %v738, 1
        %vm759 = vcmp.eq.s32.totalorder %v739, 1
        %vm760 = vcmp.eq.s32.totalorder %v740, 1
        %vm761 = vcmp.eq.s32.totalorder %v741, 1
        %vm762 = vcmp.eq.s32.totalorder %v742, 1
        %vm763 = vcmp.eq.s32.totalorder %v743, 1
        %v764 = vsel %vm744, %v575, 0.0
        %v765 = vsel %vm745, %v576, 0.0
        %v766 = vsel %vm746, %v577, 0.0
        %v767 = vsel %vm747, %v578, 0.0
        %v768 = vsel %vm748, %v579, 0.0
        %v769 = vsel %vm749, %v580, 0.0
        %v770 = vsel %vm750, %v581, 0.0
        %v771 = vsel %vm751, %v582, 0.0
        %v772 = vsel %vm752, %v583, 0.0
        %v773 = vsel %vm753, %v584, 0.0
        %v774 = vsel %vm754, %v585, 0.0
        %v775 = vsel %vm755, %v586, 0.0
        %v776 = vsel %vm756, %v587, 0.0
        %v777 = vsel %vm757, %v588, 0.0
        %v778 = vsel %vm758, %v589, 0.0
        %v779 = vsel %vm759, %v590, 0.0
        %v780 = vsel %vm760, %v591, 0.0
        %v781 = vsel %vm761, %v592, 0.0
        %v782 = vsel %vm762, %v593, 0.0
        %v783 = vsel %vm763, %v594, 0.0
        %v784 = vpack.c.bf16 %v765, %v764
        %v785 = vpack.c.bf16 %v767, %v766
        %v786 = vpack.c.bf16 %v769, %v768
        %v787 = vpack.c.bf16 %v771, %v770
        %v788 = vpack.c.bf16 %v773, %v772
        %v789 = vpack.c.bf16 %v775, %v774
        %v790 = vpack.c.bf16 %v777, %v776
        %v791 = vpack.c.bf16 %v779, %v778
        %v792 = vpack.c.bf16 %v781, %v780
        %v793 = vpack.c.bf16 %v783, %v782
        %vm794 = vcmask 261120
        %795 = vst.msk [vmem:[#allocation2 + $0x8] sm:$0xff] %vm794, %v784
        %796 = vst.msk [vmem:[#allocation2 + $0x10] sm:$0xff] %vm794, %v785
        %797 = vst.msk [vmem:[#allocation2 + $0x18] sm:$0xff] %vm794, %v786
        %798 = vst.msk [vmem:[#allocation2 + $0x20] sm:$0xff] %vm794, %v787
        %799 = vst.msk [vmem:[#allocation2 + $0x28] sm:$0xff] %vm794, %v788
        %800 = vst.msk [vmem:[#allocation2 + $0x30] sm:$0xff] %vm794, %v789
        %801 = vst.msk [vmem:[#allocation2 + $0x38] sm:$0xff] %vm794, %v790
        %802 = vst.msk [vmem:[#allocation2 + $0x40] sm:$0xff] %vm794, %v791
        %803 = vst.msk [vmem:[#allocation2 + $0x48] sm:$0xff] %vm794, %v792
        %804 = vst.msk [vmem:[#allocation2 + $0x50] sm:$0xff] %vm794, %v793
        %vm805 = vcmp.lt.s32.totalorder %v596, 0
        %v806 = vsub.s32 0, %v596
        %v807 = vsel %vm805, %v806, %v596
        %v808 = vshrl.u32 %v807, 4
        %v809 = vand.u32 %v807, 15
        %v810 = vsub.s32 0, %v809
        %v811 = vsel %vm805, %v810, %v809
        %vm812 = vcmp.lt.s32.totalorder %v597, 0
        %v813 = vsub.s32 0, %v597
        %v814 = vsel %vm812, %v813, %v597
        %v815 = vshrl.u32 %v814, 4
        %v816 = vand.u32 %v814, 15
        %v817 = vsub.s32 0, %v816
        %v818 = vsel %vm812, %v817, %v816
        %vm819 = vcmp.lt.s32.totalorder %v598, 0
        %v820 = vsub.s32 0, %v598
        %v821 = vsel %vm819, %v820, %v598
        %v822 = vshrl.u32 %v821, 4
        %v823 = vand.u32 %v821, 15
        %v824 = vsub.s32 0, %v823
        %v825 = vsel %vm819, %v824, %v823
        %vm826 = vcmp.lt.s32.totalorder %v599, 0
        %v827 = vsub.s32 0, %v599
        %v828 = vsel %vm826, %v827, %v599
        %v829 = vshrl.u32 %v828, 4
        %v830 = vand.u32 %v828, 15
        %v831 = vsub.s32 0, %v830
        %v832 = vsel %vm826, %v831, %v830
        %vm833 = vcmp.lt.s32.totalorder %v600, 0
        %v834 = vsub.s32 0, %v600
        %v835 = vsel %vm833, %v834, %v600
        %v836 = vshrl.u32 %v835, 4
        %v837 = vand.u32 %v835, 15
        %v838 = vsub.s32 0, %v837
        %v839 = vsel %vm833, %v838, %v837
        %vm840 = vcmp.lt.s32.totalorder %v601, 0
        %v841 = vsub.s32 0, %v601
        %v842 = vsel %vm840, %v841, %v601
        %v843 = vshrl.u32 %v842, 4
        %v844 = vand.u32 %v842, 15
        %v845 = vsub.s32 0, %v844
        %v846 = vsel %vm840, %v845, %v844
        %vm847 = vcmp.lt.s32.totalorder %v602, 0
        %v848 = vsub.s32 0, %v602
        %v849 = vsel %vm847, %v848, %v602
        %v850 = vshrl.u32 %v849, 4
        %v851 = vand.u32 %v849, 15
        %v852 = vsub.s32 0, %v851
        %v853 = vsel %vm847, %v852, %v851
        %vm854 = vcmp.lt.s32.totalorder %v603, 0
        %v855 = vsub.s32 0, %v603
        %v856 = vsel %vm854, %v855, %v603
        %v857 = vshrl.u32 %v856, 4
        %v858 = vand.u32 %v856, 15
        %v859 = vsub.s32 0, %v858
        %v860 = vsel %vm854, %v859, %v858
        %vm861 = vcmp.lt.s32.totalorder %v604, 0
        %v862 = vsub.s32 0, %v604
        %v863 = vsel %vm861, %v862, %v604
        %v864 = vshrl.u32 %v863, 4
        %v865 = vand.u32 %v863, 15
        %v866 = vsub.s32 0, %v865
        %v867 = vsel %vm861, %v866, %v865
        %vm868 = vcmp.lt.s32.totalorder %v605, 0
        %v869 = vsub.s32 0, %v605
        %v870 = vsel %vm868, %v869, %v605
        %v871 = vshrl.u32 %v870, 4
        %v872 = vand.u32 %v870, 15
        %v873 = vsub.s32 0, %v872
        %v874 = vsel %vm868, %v873, %v872
        %vm875 = vcmp.lt.s32.totalorder %v606, 0
        %v876 = vsub.s32 0, %v606
        %v877 = vsel %vm875, %v876, %v606
        %v878 = vshrl.u32 %v877, 4
        %v879 = vand.u32 %v877, 15
        %v880 = vsub.s32 0, %v879
        %v881 = vsel %vm875, %v880, %v879
        %vm882 = vcmp.lt.s32.totalorder %v607, 0
        %v883 = vsub.s32 0, %v607
        %v884 = vsel %vm882, %v883, %v607
        %v885 = vshrl.u32 %v884, 4
        %v886 = vand.u32 %v884, 15
        %v887 = vsub.s32 0, %v886
        %v888 = vsel %vm882, %v887, %v886
        %vm889 = vcmp.lt.s32.totalorder %v608, 0
        %v890 = vsub.s32 0, %v608
        %v891 = vsel %vm889, %v890, %v608
        %v892 = vshrl.u32 %v891, 4
        %v893 = vand.u32 %v891, 15
        %v894 = vsub.s32 0, %v893
        %v895 = vsel %vm889, %v894, %v893
        %vm896 = vcmp.lt.s32.totalorder %v609, 0
        %v897 = vsub.s32 0, %v609
        %v898 = vsel %vm896, %v897, %v609
        %v899 = vshrl.u32 %v898, 4
        %v900 = vand.u32 %v898, 15
        %v901 = vsub.s32 0, %v900
        %v902 = vsel %vm896, %v901, %v900
        %vm903 = vcmp.lt.s32.totalorder %v610, 0
        %v904 = vsub.s32 0, %v610
        %v905 = vsel %vm903, %v904, %v610
        %v906 = vshrl.u32 %v905, 4
        %v907 = vand.u32 %v905, 15
        %v908 = vsub.s32 0, %v907
        %v909 = vsel %vm903, %v908, %v907
        %vm910 = vcmp.lt.s32.totalorder %v611, 0
        %v911 = vsub.s32 0, %v611
        %v912 = vsel %vm910, %v911, %v611
        %v913 = vshrl.u32 %v912, 4
        %v914 = vand.u32 %v912, 15
        %v915 = vsub.s32 0, %v914
        %v916 = vsel %vm910, %v915, %v914
        %vm917 = vcmp.ne.s32.totalorder %v811, 0
        %vm918 = vcmp.ne.s32.totalorder %v818, 0
        %vm919 = vcmp.ne.s32.totalorder %v825, 0
        %vm920 = vcmp.ne.s32.totalorder %v832, 0
        %vm921 = vcmp.ne.s32.totalorder %v839, 0
        %vm922 = vcmp.ne.s32.totalorder %v846, 0
        %vm923 = vcmp.ne.s32.totalorder %v853, 0
        %vm924 = vcmp.ne.s32.totalorder %v860, 0
        %vm925 = vcmp.ne.s32.totalorder %v867, 0
        %vm926 = vcmp.ne.s32.totalorder %v874, 0
        %vm927 = vcmp.ne.s32.totalorder %v881, 0
        %vm928 = vcmp.ne.s32.totalorder %v888, 0
        %vm929 = vcmp.ne.s32.totalorder %v895, 0
        %vm930 = vcmp.ne.s32.totalorder %v902, 0
        %vm931 = vcmp.ne.s32.totalorder %v909, 0
        %vm932 = vcmp.ne.s32.totalorder %v916, 0
        %vm933 = vcmp.lt.s32.totalorder %v811, 0
        %vm934 = vcmp.lt.s32.totalorder %v818, 0
        %vm935 = vcmp.lt.s32.totalorder %v825, 0
        %vm936 = vcmp.lt.s32.totalorder %v832, 0
        %vm937 = vcmp.lt.s32.totalorder %v839, 0
        %vm938 = vcmp.lt.s32.totalorder %v846, 0
        %vm939 = vcmp.lt.s32.totalorder %v853, 0
        %vm940 = vcmp.lt.s32.totalorder %v860, 0
        %vm941 = vcmp.lt.s32.totalorder %v867, 0
        %vm942 = vcmp.lt.s32.totalorder %v874, 0
        %vm943 = vcmp.lt.s32.totalorder %v881, 0
        %vm944 = vcmp.lt.s32.totalorder %v888, 0
        %vm945 = vcmp.lt.s32.totalorder %v895, 0
        %vm946 = vcmp.lt.s32.totalorder %v902, 0
        %vm947 = vcmp.lt.s32.totalorder %v909, 0
        %vm948 = vcmp.lt.s32.totalorder %v916, 0
        %vm949 = vmand %vm933, %vm917
        %vm950 = vmand %vm934, %vm918
        %vm951 = vmand %vm935, %vm919
        %vm952 = vmand %vm936, %vm920
        %vm953 = vmand %vm937, %vm921
        %vm954 = vmand %vm938, %vm922
        %vm955 = vmand %vm939, %vm923
        %vm956 = vmand %vm940, %vm924
        %vm957 = vmand %vm941, %vm925
        %vm958 = vmand %vm942, %vm926
        %vm959 = vmand %vm943, %vm927
        %vm960 = vmand %vm944, %vm928
        %vm961 = vmand %vm945, %vm929
        %vm962 = vmand %vm946, %vm930
        %vm963 = vmand %vm947, %vm931
        %vm964 = vmand %vm948, %vm932
        %v965 = vadd.s32 %v811, 16
        %v966 = vadd.s32 %v818, 16
        %v967 = vadd.s32 %v825, 16
        %v968 = vadd.s32 %v832, 16
        %v969 = vadd.s32 %v839, 16
        %v970 = vadd.s32 %v846, 16
        %v971 = vadd.s32 %v853, 16
        %v972 = vadd.s32 %v860, 16
        %v973 = vadd.s32 %v867, 16
        %v974 = vadd.s32 %v874, 16
        %v975 = vadd.s32 %v881, 16
        %v976 = vadd.s32 %v888, 16
        %v977 = vadd.s32 %v895, 16
        %v978 = vadd.s32 %v902, 16
        %v979 = vadd.s32 %v909, 16
        %v980 = vadd.s32 %v916, 16
        %v981 = vsel %vm949, %v965, %v811
        %v982 = vsel %vm950, %v966, %v818
        %v983 = vsel %vm951, %v967, %v825
        %v984 = vsel %vm952, %v968, %v832
        %v985 = vsel %vm953, %v969, %v839
        %v986 = vsel %vm954, %v970, %v846
        %v987 = vsel %vm955, %v971, %v853
        %v988 = vsel %vm956, %v972, %v860
        %v989 = vsel %vm957, %v973, %v867
        %v990 = vsel %vm958, %v974, %v874
        %v991 = vsel %vm959, %v975, %v881
        %v992 = vsel %vm960, %v976, %v888
        %v993 = vsel %vm961, %v977, %v895
        %v994 = vsel %vm962, %v978, %v902
        %v995 = vsel %vm963, %v979, %v909
        %v996 = vsel %vm964, %v980, %v916
        %vm997 = vcmp.ne.s32.totalorder %v981, 0
        %vm998 = vcmp.ne.s32.totalorder %v982, 0
        %vm999 = vcmp.ne.s32.totalorder %v983, 0
        %vm1000 = vcmp.ne.s32.totalorder %v984, 0
        %vm1001 = vcmp.ne.s32.totalorder %v985, 0
        %vm1002 = vcmp.ne.s32.totalorder %v986, 0
        %vm1003 = vcmp.ne.s32.totalorder %v987, 0
        %vm1004 = vcmp.ne.s32.totalorder %v988, 0
        %vm1005 = vcmp.ne.s32.totalorder %v989, 0
        %vm1006 = vcmp.ne.s32.totalorder %v990, 0
        %vm1007 = vcmp.ne.s32.totalorder %v991, 0
        %vm1008 = vcmp.ne.s32.totalorder %v992, 0
        %vm1009 = vcmp.ne.s32.totalorder %v993, 0
        %vm1010 = vcmp.ne.s32.totalorder %v994, 0
        %vm1011 = vcmp.ne.s32.totalorder %v995, 0
        %vm1012 = vcmp.ne.s32.totalorder %v996, 0
        %vm1013 = vcmp.ne.s32.totalorder %v981, 15
        %vm1014 = vcmp.ne.s32.totalorder %v982, 15
        %vm1015 = vcmp.ne.s32.totalorder %v983, 15
        %vm1016 = vcmp.ne.s32.totalorder %v984, 15
        %vm1017 = vcmp.ne.s32.totalorder %v985, 15
        %vm1018 = vcmp.ne.s32.totalorder %v986, 15
        %vm1019 = vcmp.ne.s32.totalorder %v987, 15
        %vm1020 = vcmp.ne.s32.totalorder %v988, 15
        %vm1021 = vcmp.ne.s32.totalorder %v989, 15
        %vm1022 = vcmp.ne.s32.totalorder %v990, 15
        %vm1023 = vcmp.ne.s32.totalorder %v991, 15
        %vm1024 = vcmp.ne.s32.totalorder %v992, 15
        %vm1025 = vcmp.ne.s32.totalorder %v993, 15
        %vm1026 = vcmp.ne.s32.totalorder %v994, 15
        %vm1027 = vcmp.ne.s32.totalorder %v995, 15
        %vm1028 = vcmp.ne.s32.totalorder %v996, 15
        %v1029 = vld [vmem:[#allocation2] sm:$0x80]
        %v1030 = vld [vmem:[#allocation2 + $0x8] sm:$0xff]
        %v1031 = vld [vmem:[#allocation2 + $0x10] sm:$0xff]
        %v1032 = vld [vmem:[#allocation2 + $0x18] sm:$0xff]
        %v1033 = vld [vmem:[#allocation2 + $0x20] sm:$0xff]
        %v1034 = vld [vmem:[#allocation2 + $0x28] sm:$0xff]
        %v1035 = vld [vmem:[#allocation2 + $0x30] sm:$0xff]
        %v1036 = vld [vmem:[#allocation2 + $0x38] sm:$0xff]
        %v1037 = vld [vmem:[#allocation2 + $0x40] sm:$0xff]
        %v1038 = vld [vmem:[#allocation2 + $0x48] sm:$0x1]
        %v1039 = vsel %vm997, 1, 0
        %v1040 = vsel %vm998, 1, 0
        %v1041 = vsel %vm999, 1, 0
        %v1042 = vsel %vm1000, 1, 0
        %v1043 = vsel %vm1001, 1, 0
        %v1044 = vsel %vm1002, 1, 0
        %v1045 = vsel %vm1003, 1, 0
        %v1046 = vsel %vm1004, 1, 0
        %v1047 = vsel %vm1005, 1, 0
        %v1048 = vsel %vm1006, 1, 0
        %v1049 = vsel %vm1007, 1, 0
        %v1050 = vsel %vm1008, 1, 0
        %v1051 = vsel %vm1009, 1, 0
        %v1052 = vsel %vm1010, 1, 0
        %v1053 = vsel %vm1011, 1, 0
        %v1054 = vsel %vm1012, 1, 0
        %vm1055 = vcmp.eq.s32.totalorder %v1039, 1
        %vm1056 = vcmp.eq.s32.totalorder %v1040, 1
        %vm1057 = vcmp.eq.s32.totalorder %v1041, 1
        %vm1058 = vcmp.eq.s32.totalorder %v1042, 1
        %vm1059 = vcmp.eq.s32.totalorder %v1043, 1
        %vm1060 = vcmp.eq.s32.totalorder %v1044, 1
        %vm1061 = vcmp.eq.s32.totalorder %v1045, 1
        %vm1062 = vcmp.eq.s32.totalorder %v1046, 1
        %vm1063 = vcmp.eq.s32.totalorder %v1047, 1
        %vm1064 = vcmp.eq.s32.totalorder %v1048, 1
        %vm1065 = vcmp.eq.s32.totalorder %v1049, 1
        %vm1066 = vcmp.eq.s32.totalorder %v1050, 1
        %vm1067 = vcmp.eq.s32.totalorder %v1051, 1
        %vm1068 = vcmp.eq.s32.totalorder %v1052, 1
        %vm1069 = vcmp.eq.s32.totalorder %v1053, 1
        %vm1070 = vcmp.eq.s32.totalorder %v1054, 1
        %vm1071 = vmpackc.low %vm1055, %vm1055
        %vm1072 = vmpackc.low %vm1056, %vm1056
        %vm1073 = vmpackc.low %vm1057, %vm1057
        %vm1074 = vmpackc.low %vm1058, %vm1058
        %vm1075 = vmpackc.low %vm1059, %vm1059
        %vm1076 = vmpackc.low %vm1060, %vm1060
        %vm1077 = vmpackc.low %vm1061, %vm1061
        %vm1078 = vmpackc.low %vm1062, %vm1062
        %vm1079 = vmpackc.low %vm1063, %vm1063
        %vm1080 = vmpackc.low %vm1064, %vm1064
        %vm1081 = vmpackc.low %vm1065, %vm1065
        %vm1082 = vmpackc.low %vm1066, %vm1066
        %vm1083 = vmpackc.low %vm1067, %vm1067
        %vm1084 = vmpackc.low %vm1068, %vm1068
        %vm1085 = vmpackc.low %vm1069, %vm1069
        %vm1086 = vmpackc.low %vm1070, %vm1070
        %v1087 = vsel %vm1071, 65537, 0
        %v1088 = vsel %vm1072, 65537, 0
        %v1089 = vsel %vm1073, 65537, 0
        %v1090 = vsel %vm1074, 65537, 0
        %v1091 = vsel %vm1075, 65537, 0
        %v1092 = vsel %vm1076, 65537, 0
        %v1093 = vsel %vm1077, 65537, 0
        %v1094 = vsel %vm1078, 65537, 0
        %v1095 = vsel %vm1079, 65537, 0
        %v1096 = vsel %vm1080, 65537, 0
        %v1097 = vsel %vm1081, 65537, 0
        %v1098 = vsel %vm1082, 65537, 0
        %v1099 = vsel %vm1083, 65537, 0
        %v1100 = vsel %vm1084, 65537, 0
        %v1101 = vsel %vm1085, 65537, 0
        %v1102 = vsel %vm1086, 65537, 0
        %v1103 = vunpack.c.l.b16 %v1087
        %v1104 = vunpack.c.l.b16 %v1088
        %v1105 = vunpack.c.l.b16 %v1089
        %v1106 = vunpack.c.l.b16 %v1090
        %v1107 = vunpack.c.l.b16 %v1091
        %v1108 = vunpack.c.l.b16 %v1092
        %v1109 = vunpack.c.l.b16 %v1093
        %v1110 = vunpack.c.l.b16 %v1094
        %v1111 = vunpack.c.l.b16 %v1095
        %v1112 = vunpack.c.l.b16 %v1096
        %v1113 = vunpack.c.l.b16 %v1097
        %v1114 = vunpack.c.l.b16 %v1098
        %v1115 = vunpack.c.l.b16 %v1099
        %v1116 = vunpack.c.l.b16 %v1100
        %v1117 = vunpack.c.l.b16 %v1101
        %v1118 = vunpack.c.l.b16 %v1102
        %v1119 = vpack.c.b16 %v1104, %v1103
        %v1120 = vpack.c.b16 %v1106, %v1105
        %v1121 = vpack.c.b16 %v1108, %v1107
        %v1122 = vpack.c.b16 %v1110, %v1109
        %v1123 = vpack.c.b16 %v1112, %v1111
        %v1124 = vpack.c.b16 %v1114, %v1113
        %v1125 = vpack.c.b16 %v1116, %v1115
        %v1126 = vpack.c.b16 %v1118, %v1117
        %vm1127 = vsmask.f32 7424
        %v1129 = vshll.u32 %v1119, 16
        %v1131 = vrot.slane %v1129, 1
        %v1132 = vshrl.u32 %v1119, 16
        %v1134 = vor.u32 %v1132, %v1131
        %v1136 = vshll.u32 %v1120, 16
        %v1138 = vrot.slane %v1136, 1
        %v1139 = vsel %vm1127, %v1134, %v1138
        %v1140 = vshrl.u32 %v1120, 16
        %v1142 = vor.u32 %v1140, %v1138
        %v1144 = vshll.u32 %v1121, 16
        %v1146 = vrot.slane %v1144, 1
        %v1147 = vsel %vm1127, %v1142, %v1146
        %v1148 = vshrl.u32 %v1121, 16
        %v1150 = vor.u32 %v1148, %v1146
        %v1152 = vshll.u32 %v1122, 16
        %v1154 = vrot.slane %v1152, 1
        %v1155 = vsel %vm1127, %v1150, %v1154
        %v1156 = vshrl.u32 %v1122, 16
        %v1158 = vor.u32 %v1156, %v1154
        %v1160 = vshll.u32 %v1123, 16
        %v1162 = vrot.slane %v1160, 1
        %v1163 = vsel %vm1127, %v1158, %v1162
        %v1164 = vshrl.u32 %v1123, 16
        %v1166 = vor.u32 %v1164, %v1162
        %v1168 = vshll.u32 %v1124, 16
        %v1170 = vrot.slane %v1168, 1
        %v1171 = vsel %vm1127, %v1166, %v1170
        %v1172 = vshrl.u32 %v1124, 16
        %v1174 = vor.u32 %v1172, %v1170
        %v1176 = vshll.u32 %v1125, 16
        %v1178 = vrot.slane %v1176, 1
        %v1179 = vsel %vm1127, %v1174, %v1178
        %v1180 = vshrl.u32 %v1125, 16
        %v1182 = vor.u32 %v1180, %v1178
        %v1184 = vshll.u32 %v1126, 16
        %v1186 = vrot.slane %v1184, 1
        %v1187 = vsel %vm1127, %v1182, %v1186
        %v1188 = vshrl.u32 %v1126, 16
        %v1190 = vor.u32 %v1188, %v1186
        %vm1191 = vcmp.ne.s16.totalorder %v1131, 0
        %vm1192 = vcmp.ne.s16.totalorder %v1139, 0
        %vm1193 = vcmp.ne.s16.totalorder %v1147, 0
        %vm1194 = vcmp.ne.s16.totalorder %v1155, 0
        %vm1195 = vcmp.ne.s16.totalorder %v1163, 0
        %vm1196 = vcmp.ne.s16.totalorder %v1171, 0
        %vm1197 = vcmp.ne.s16.totalorder %v1179, 0
        %vm1198 = vcmp.ne.s16.totalorder %v1187, 0
        %vm1199 = vcmp.ne.s16.totalorder %v1190, 0
        %v1200 = vsel %vm1191, %v1029, 0
        %v1201 = vsel %vm1192, %v1030, 0
        %v1202 = vsel %vm1193, %v1031, 0
        %v1203 = vsel %vm1194, %v1032, 0
        %v1204 = vsel %vm1195, %v1033, 0
        %v1205 = vsel %vm1196, %v1034, 0
        %v1206 = vsel %vm1197, %v1035, 0
        %v1207 = vsel %vm1198, %v1036, 0
        %v1208 = vsel %vm1199, %v1037, 0
        %v1209 = vsel %vm1013, 1, 0
        %v1210 = vsel %vm1014, 1, 0
        %v1211 = vsel %vm1015, 1, 0
        %v1212 = vsel %vm1016, 1, 0
        %v1213 = vsel %vm1017, 1, 0
        %v1214 = vsel %vm1018, 1, 0
        %v1215 = vsel %vm1019, 1, 0
        %v1216 = vsel %vm1020, 1, 0
        %v1217 = vsel %vm1021, 1, 0
        %v1218 = vsel %vm1022, 1, 0
        %v1219 = vsel %vm1023, 1, 0
        %v1220 = vsel %vm1024, 1, 0
        %v1221 = vsel %vm1025, 1, 0
        %v1222 = vsel %vm1026, 1, 0
        %v1223 = vsel %vm1027, 1, 0
        %v1224 = vsel %vm1028, 1, 0
        %vm1225 = vcmp.eq.s32.totalorder %v1209, 1
        %vm1226 = vcmp.eq.s32.totalorder %v1210, 1
        %vm1227 = vcmp.eq.s32.totalorder %v1211, 1
        %vm1228 = vcmp.eq.s32.totalorder %v1212, 1
        %vm1229 = vcmp.eq.s32.totalorder %v1213, 1
        %vm1230 = vcmp.eq.s32.totalorder %v1214, 1
        %vm1231 = vcmp.eq.s32.totalorder %v1215, 1
        %vm1232 = vcmp.eq.s32.totalorder %v1216, 1
        %vm1233 = vcmp.eq.s32.totalorder %v1217, 1
        %vm1234 = vcmp.eq.s32.totalorder %v1218, 1
        %vm1235 = vcmp.eq.s32.totalorder %v1219, 1
        %vm1236 = vcmp.eq.s32.totalorder %v1220, 1
        %vm1237 = vcmp.eq.s32.totalorder %v1221, 1
        %vm1238 = vcmp.eq.s32.totalorder %v1222, 1
        %vm1239 = vcmp.eq.s32.totalorder %v1223, 1
        %vm1240 = vcmp.eq.s32.totalorder %v1224, 1
        %vm1241 = vmpackc.low %vm1225, %vm1225
        %vm1242 = vmpackc.low %vm1226, %vm1226
        %vm1243 = vmpackc.low %vm1227, %vm1227
        %vm1244 = vmpackc.low %vm1228, %vm1228
        %vm1245 = vmpackc.low %vm1229, %vm1229
        %vm1246 = vmpackc.low %vm1230, %vm1230
        %vm1247 = vmpackc.low %vm1231, %vm1231
        %vm1248 = vmpackc.low %vm1232, %vm1232
        %vm1249 = vmpackc.low %vm1233, %vm1233
        %vm1250 = vmpackc.low %vm1234, %vm1234
        %vm1251 = vmpackc.low %vm1235, %vm1235
        %vm1252 = vmpackc.low %vm1236, %vm1236
        %vm1253 = vmpackc.low %vm1237, %vm1237
        %vm1254 = vmpackc.low %vm1238, %vm1238
        %vm1255 = vmpackc.low %vm1239, %vm1239
        %vm1256 = vmpackc.low %vm1240, %vm1240
        %v1257 = vsel %vm1241, 65537, 0
        %v1258 = vsel %vm1242, 65537, 0
        %v1259 = vsel %vm1243, 65537, 0
        %v1260 = vsel %vm1244, 65537, 0
        %v1261 = vsel %vm1245, 65537, 0
        %v1262 = vsel %vm1246, 65537, 0
        %v1263 = vsel %vm1247, 65537, 0
        %v1264 = vsel %vm1248, 65537, 0
        %v1265 = vsel %vm1249, 65537, 0
        %v1266 = vsel %vm1250, 65537, 0
        %v1267 = vsel %vm1251, 65537, 0
        %v1268 = vsel %vm1252, 65537, 0
        %v1269 = vsel %vm1253, 65537, 0
        %v1270 = vsel %vm1254, 65537, 0
        %v1271 = vsel %vm1255, 65537, 0
        %v1272 = vsel %vm1256, 65537, 0
        %v1273 = vunpack.c.l.b16 %v1257
        %v1274 = vunpack.c.l.b16 %v1258
        %v1275 = vunpack.c.l.b16 %v1259
        %v1276 = vunpack.c.l.b16 %v1260
        %v1277 = vunpack.c.l.b16 %v1261
        %v1278 = vunpack.c.l.b16 %v1262
        %v1279 = vunpack.c.l.b16 %v1263
        %v1280 = vunpack.c.l.b16 %v1264
        %v1281 = vunpack.c.l.b16 %v1265
        %v1282 = vunpack.c.l.b16 %v1266
        %v1283 = vunpack.c.l.b16 %v1267
        %v1284 = vunpack.c.l.b16 %v1268
        %v1285 = vunpack.c.l.b16 %v1269
        %v1286 = vunpack.c.l.b16 %v1270
        %v1287 = vunpack.c.l.b16 %v1271
        %v1288 = vunpack.c.l.b16 %v1272
        %v1289 = vpack.c.b16 %v1274, %v1273
        %v1290 = vpack.c.b16 %v1276, %v1275
        %v1291 = vpack.c.b16 %v1278, %v1277
        %v1292 = vpack.c.b16 %v1280, %v1279
        %v1293 = vpack.c.b16 %v1282, %v1281
        %v1294 = vpack.c.b16 %v1284, %v1283
        %v1295 = vpack.c.b16 %v1286, %v1285
        %v1296 = vpack.c.b16 %v1288, %v1287
        %vm1297 = vsmask.f32 256
        %v1299 = vshrl.u32 %v1289, 16
        %v1301 = vrot.slane %v1299, 7
        %v1302 = vshll.u32 %v1289, 16
        %v1304 = vor.u32 %v1301, %v1302
        %v1306 = vshrl.u32 %v1290, 16
        %v1308 = vrot.slane %v1306, 7
        %v1309 = vshll.u32 %v1290, 16
        %v1311 = vor.u32 %v1308, %v1309
        %v1312 = vsel %vm1297, %v1301, %v1311
        %v1314 = vshrl.u32 %v1291, 16
        %v1316 = vrot.slane %v1314, 7
        %v1317 = vshll.u32 %v1291, 16
        %v1319 = vor.u32 %v1316, %v1317
        %v1320 = vsel %vm1297, %v1308, %v1319
        %v1322 = vshrl.u32 %v1292, 16
        %v1324 = vrot.slane %v1322, 7
        %v1325 = vshll.u32 %v1292, 16
        %v1327 = vor.u32 %v1324, %v1325
        %v1328 = vsel %vm1297, %v1316, %v1327
        %v1330 = vshrl.u32 %v1293, 16
        %v1332 = vrot.slane %v1330, 7
        %v1333 = vshll.u32 %v1293, 16
        %v1335 = vor.u32 %v1332, %v1333
        %v1336 = vsel %vm1297, %v1324, %v1335
        %v1338 = vshrl.u32 %v1294, 16
        %v1340 = vrot.slane %v1338, 7
        %v1341 = vshll.u32 %v1294, 16
        %v1343 = vor.u32 %v1340, %v1341
        %v1344 = vsel %vm1297, %v1332, %v1343
        %v1346 = vshrl.u32 %v1295, 16
        %v1348 = vrot.slane %v1346, 7
        %v1349 = vshll.u32 %v1295, 16
        %v1351 = vor.u32 %v1348, %v1349
        %v1352 = vsel %vm1297, %v1340, %v1351
        %v1354 = vshrl.u32 %v1296, 16
        %v1356 = vrot.slane %v1354, 7
        %v1357 = vshll.u32 %v1296, 16
        %v1359 = vor.u32 %v1356, %v1357
        %v1360 = vsel %vm1297, %v1348, %v1359
        %vm1361 = vcmp.ne.s16.totalorder %v1304, 0
        %vm1362 = vcmp.ne.s16.totalorder %v1312, 0
        %vm1363 = vcmp.ne.s16.totalorder %v1320, 0
        %vm1364 = vcmp.ne.s16.totalorder %v1328, 0
        %vm1365 = vcmp.ne.s16.totalorder %v1336, 0
        %vm1366 = vcmp.ne.s16.totalorder %v1344, 0
        %vm1367 = vcmp.ne.s16.totalorder %v1352, 0
        %vm1368 = vcmp.ne.s16.totalorder %v1360, 0
        %vm1369 = vcmp.ne.s16.totalorder %v1356, 0
        %v1370 = vsel %vm1361, %v1030, 0
        %v1371 = vsel %vm1362, %v1031, 0
        %v1372 = vsel %vm1363, %v1032, 0
        %v1373 = vsel %vm1364, %v1033, 0
        %v1374 = vsel %vm1365, %v1034, 0
        %v1375 = vsel %vm1366, %v1035, 0
        %v1376 = vsel %vm1367, %v1036, 0
        %v1377 = vsel %vm1368, %v1037, 0
        %v1378 = vsel %vm1369, %v1038, 0
        %v1380 = vshll.u32 %v1030, 16
        %v1382 = vrot.slane %v1380, 1
        %v1383 = vshrl.u32 %v1030, 16
        %v1385 = vor.u32 %v1383, %v1382
        %v1387 = vshll.u32 %v1031, 16
        %v1389 = vrot.slane %v1387, 1
        %v1390 = vsel %vm1127, %v1385, %v1389
        %v1391 = vshrl.u32 %v1031, 16
        %v1393 = vor.u32 %v1391, %v1389
        %v1395 = vshll.u32 %v1032, 16
        %v1397 = vrot.slane %v1395, 1
        %v1398 = vsel %vm1127, %v1393, %v1397
        %v1399 = vshrl.u32 %v1032, 16
        %v1401 = vor.u32 %v1399, %v1397
        %v1403 = vshll.u32 %v1033, 16
        %v1405 = vrot.slane %v1403, 1
        %v1406 = vsel %vm1127, %v1401, %v1405
        %v1407 = vshrl.u32 %v1033, 16
        %v1409 = vor.u32 %v1407, %v1405
        %v1411 = vshll.u32 %v1034, 16
        %v1413 = vrot.slane %v1411, 1
        %v1414 = vsel %vm1127, %v1409, %v1413
        %v1415 = vshrl.u32 %v1034, 16
        %v1417 = vor.u32 %v1415, %v1413
        %v1419 = vshll.u32 %v1035, 16
        %v1421 = vrot.slane %v1419, 1
        %v1422 = vsel %vm1127, %v1417, %v1421
        %v1423 = vshrl.u32 %v1035, 16
        %v1425 = vor.u32 %v1423, %v1421
        %v1427 = vshll.u32 %v1036, 16
        %v1429 = vrot.slane %v1427, 1
        %v1430 = vsel %vm1127, %v1425, %v1429
        %v1431 = vshrl.u32 %v1036, 16
        %v1433 = vor.u32 %v1431, %v1429
        %v1435 = vshll.u32 %v1037, 16
        %v1437 = vrot.slane %v1435, 1
        %v1438 = vsel %vm1127, %v1433, %v1437
        %v1439 = vshrl.u32 %v1037, 16
        %v1441 = vor.u32 %v1439, %v1437
        %1442 = vrot.lane.b32.xlu0 %v1382, 32
        %v1443 = vpop.permute.xlu0 %1442
        %1444 = vrot.lane.b32.xlu0 %v1390, 32
        %v1445 = vpop.permute.xlu0 %1444
        %1446 = vrot.lane.b32.xlu0 %v1398, 32
        %v1447 = vpop.permute.xlu0 %1446
        %1448 = vrot.lane.b32.xlu0 %v1406, 32
        %v1449 = vpop.permute.xlu0 %1448
        %1450 = vrot.lane.b32.xlu0 %v1414, 32
        %v1451 = vpop.permute.xlu0 %1450
        %1452 = vrot.lane.b32.xlu0 %v1422, 32
        %v1453 = vpop.permute.xlu0 %1452
        %1454 = vrot.lane.b32.xlu0 %v1430, 32
        %v1455 = vpop.permute.xlu0 %1454
        %1456 = vrot.lane.b32.xlu0 %v1438, 32
        %v1457 = vpop.permute.xlu0 %1456
        %1458 = vrot.lane.b32.xlu0 %v1441, 32
        %v1459 = vpop.permute.xlu0 %1458
        %vm1469 = vcmask 1046528
        %v1470 = vrot.slane %v1370, 1
        %v1471 = vrot.slane %v1371, 1
        %v1472 = vsel %vm1469, %v1470, %v1471
        %v1473 = vrot.slane %v1372, 1
        %v1474 = vsel %vm1469, %v1471, %v1473
        %v1475 = vrot.slane %v1373, 1
        %v1476 = vsel %vm1469, %v1473, %v1475
        %v1477 = vrot.slane %v1374, 1
        %v1478 = vsel %vm1469, %v1475, %v1477
        %v1479 = vrot.slane %v1375, 1
        %v1480 = vsel %vm1469, %v1477, %v1479
        %v1481 = vrot.slane %v1376, 1
        %v1482 = vsel %vm1469, %v1479, %v1481
        %v1483 = vrot.slane %v1377, 1
        %v1484 = vsel %vm1469, %v1481, %v1483
        %v1485 = vrot.slane %v1378, 1
        %v1486 = vsel %vm1469, %v1483, %v1485
        %1487 = vrot.lane.b32.xlu0 %v1470, 64
        %v1488 = vpop.permute.xlu0 %1487
        %1489 = vrot.lane.b32.xlu0 %v1472, 64
        %v1490 = vpop.permute.xlu0 %1489
        %1491 = vrot.lane.b32.xlu0 %v1474, 64
        %v1492 = vpop.permute.xlu0 %1491
        %1493 = vrot.lane.b32.xlu0 %v1476, 64
        %v1494 = vpop.permute.xlu0 %1493
        %1495 = vrot.lane.b32.xlu0 %v1478, 64
        %v1496 = vpop.permute.xlu0 %1495
        %1497 = vrot.lane.b32.xlu0 %v1480, 64
        %v1498 = vpop.permute.xlu0 %1497
        %1499 = vrot.lane.b32.xlu0 %v1482, 64
        %v1500 = vpop.permute.xlu0 %1499
        %1501 = vrot.lane.b32.xlu0 %v1484, 64
        %v1502 = vpop.permute.xlu0 %1501
        %1503 = vrot.lane.b32.xlu0 %v1486, 64
        %v1504 = vpop.permute.xlu0 %1503
        %v1507 = vsel %vm794, %v1200, %v1443
        %v1510 = vsel %vm794, %v1201, %v1445
        %v1513 = vsel %vm794, %v1202, %v1447
        %v1516 = vsel %vm794, %v1203, %v1449
        %v1519 = vsel %vm794, %v1204, %v1451
        %v1522 = vsel %vm794, %v1205, %v1453
        %v1525 = vsel %vm794, %v1206, %v1455
        %v1528 = vsel %vm794, %v1207, %v1457
        %v1531 = vsel %vm794, %v1208, %v1459
        %vm1532 = vcmask 523264
        %v1534 = vsel %vm1532, %v1507, %v1488
        %v1536 = vsel %vm1532, %v1510, %v1490
        %v1538 = vsel %vm1532, %v1513, %v1492
        %v1540 = vsel %vm1532, %v1516, %v1494
        %v1542 = vsel %vm1532, %v1519, %v1496
        %v1544 = vsel %vm1532, %v1522, %v1498
        %v1546 = vsel %vm1532, %v1525, %v1500
        %v1548 = vsel %vm1532, %v1528, %v1502
        %v1550 = vsel %vm1532, %v1531, %v1504
        %v1551 = vld [vmem:[%s3] sm:$0xf]
        %v1552 = vld [vmem:[%s3 + $0x4] sm:$0xf]
        %v1553 = vld [vmem:[%s3 + $0x8] sm:$0xf]
        %v1554 = vld [vmem:[%s3 + $0xc] sm:$0xf]
        %v1555 = vld [vmem:[%s3 + $0x10] sm:$0xf]
        %v1556 = vld [vmem:[%s3 + $0x14] sm:$0xf]
        %v1557 = vld [vmem:[%s3 + $0x18] sm:$0xf]
        %v1558 = vld [vmem:[%s3 + $0x1c] sm:$0xf]
        %v1559 = vld [vmem:[%s3 + $0x20] sm:$0xf]
        %v1560 = vld [vmem:[%s3 + $0x24] sm:$0xf]
        %v1561 = vld [vmem:[%s3 + $0x28] sm:$0xf]
        %v1562 = vld [vmem:[%s3 + $0x2c] sm:$0xf]
        %v1563 = vld [vmem:[#allocation2 + $0x8] sm:$0x80]
        %v1564 = vld [vmem:[#allocation2 + $0x48] sm:$0xff]
        %v1565 = vld [vmem:[#allocation2 + $0x50] sm:$0x1]
        %v1566 = vsel %vm1191, %v1563, 0
        %v1567 = vsel %vm1192, %v1031, 0
        %v1568 = vsel %vm1193, %v1032, 0
        %v1569 = vsel %vm1194, %v1033, 0
        %v1570 = vsel %vm1195, %v1034, 0
        %v1571 = vsel %vm1196, %v1035, 0
        %v1572 = vsel %vm1197, %v1036, 0
        %v1573 = vsel %vm1198, %v1037, 0
        %v1574 = vsel %vm1199, %v1564, 0
        %v1575 = vsel %vm1361, %v1031, 0
        %v1576 = vsel %vm1362, %v1032, 0
        %v1577 = vsel %vm1363, %v1033, 0
        %v1578 = vsel %vm1364, %v1034, 0
        %v1579 = vsel %vm1365, %v1035, 0
        %v1580 = vsel %vm1366, %v1036, 0
        %v1581 = vsel %vm1367, %v1037, 0
        %v1582 = vsel %vm1368, %v1564, 0
        %v1583 = vsel %vm1369, %v1565, 0
        %v1585 = vshll.u32 %v1564, 16
        %v1587 = vrot.slane %v1585, 1
        %v1588 = vsel %vm1127, %v1441, %v1587
        %v1589 = vshrl.u32 %v1564, 16
        %v1591 = vor.u32 %v1589, %v1587
        %1592 = vrot.lane.b32.xlu0 %v1389, 32
        %v1593 = vpop.permute.xlu0 %1592
        %1594 = vrot.lane.b32.xlu0 %v1588, 32
        %v1595 = vpop.permute.xlu0 %1594
        %1596 = vrot.lane.b32.xlu0 %v1591, 32
        %v1597 = vpop.permute.xlu0 %1596
        %v1607 = vrot.slane %v1575, 1
        %v1608 = vrot.slane %v1576, 1
        %v1609 = vsel %vm1469, %v1607, %v1608
        %v1610 = vrot.slane %v1577, 1
        %v1611 = vsel %vm1469, %v1608, %v1610
        %v1612 = vrot.slane %v1578, 1
        %v1613 = vsel %vm1469, %v1610, %v1612
        %v1614 = vrot.slane %v1579, 1
        %v1615 = vsel %vm1469, %v1612, %v1614
        %v1616 = vrot.slane %v1580, 1
        %v1617 = vsel %vm1469, %v1614, %v1616
        %v1618 = vrot.slane %v1581, 1
        %v1619 = vsel %vm1469, %v1616, %v1618
        %v1620 = vrot.slane %v1582, 1
        %v1621 = vsel %vm1469, %v1618, %v1620
        %v1622 = vrot.slane %v1583, 1
        %v1623 = vsel %vm1469, %v1620, %v1622
        %1624 = vrot.lane.b32.xlu0 %v1607, 64
        %v1625 = vpop.permute.xlu0 %1624
        %1626 = vrot.lane.b32.xlu0 %v1609, 64
        %v1627 = vpop.permute.xlu0 %1626
        %1628 = vrot.lane.b32.xlu0 %v1611, 64
        %v1629 = vpop.permute.xlu0 %1628
        %1630 = vrot.lane.b32.xlu0 %v1613, 64
        %v1631 = vpop.permute.xlu0 %1630
        %1632 = vrot.lane.b32.xlu0 %v1615, 64
        %v1633 = vpop.permute.xlu0 %1632
        %1634 = vrot.lane.b32.xlu0 %v1617, 64
        %v1635 = vpop.permute.xlu0 %1634
        %1636 = vrot.lane.b32.xlu0 %v1619, 64
        %v1637 = vpop.permute.xlu0 %1636
        %1638 = vrot.lane.b32.xlu0 %v1621, 64
        %v1639 = vpop.permute.xlu0 %1638
        %1640 = vrot.lane.b32.xlu0 %v1623, 64
        %v1641 = vpop.permute.xlu0 %1640
        %v1644 = vsel %vm794, %v1566, %v1593
        %v1646 = vsel %vm794, %v1567, %v1447
        %v1648 = vsel %vm794, %v1568, %v1449
        %v1650 = vsel %vm794, %v1569, %v1451
        %v1652 = vsel %vm794, %v1570, %v1453
        %v1654 = vsel %vm794, %v1571, %v1455
        %v1656 = vsel %vm794, %v1572, %v1457
        %v1659 = vsel %vm794, %v1573, %v1595
        %v1662 = vsel %vm794, %v1574, %v1597
        %v1664 = vsel %vm1532, %v1644, %v1625
        %v1666 = vsel %vm1532, %v1646, %v1627
        %v1668 = vsel %vm1532, %v1648, %v1629
        %v1670 = vsel %vm1532, %v1650, %v1631
        %v1672 = vsel %vm1532, %v1652, %v1633
        %v1674 = vsel %vm1532, %v1654, %v1635
        %v1676 = vsel %vm1532, %v1656, %v1637
        %v1678 = vsel %vm1532, %v1659, %v1639
        %v1680 = vsel %vm1532, %v1662, %v1641
        %s1681 = scalar_lea.vmem %s3, 48
        %v1682 = vld [vmem:[%s1681] sm:$0xf]
        %v1683 = vld [vmem:[%s1681 + $0x4] sm:$0xf]
        %v1684 = vld [vmem:[%s1681 + $0x8] sm:$0xf]
        %v1685 = vld [vmem:[%s1681 + $0xc] sm:$0xf]
        %v1686 = vld [vmem:[%s1681 + $0x10] sm:$0xf]
        %v1687 = vld [vmem:[%s1681 + $0x14] sm:$0xf]
        %v1688 = vld [vmem:[%s1681 + $0x18] sm:$0xf]
        %v1689 = vld [vmem:[%s1681 + $0x1c] sm:$0xf]
        %v1690 = vld [vmem:[%s1681 + $0x20] sm:$0xf]
        %v1691 = vld [vmem:[%s1681 + $0x24] sm:$0xf]
        %v1692 = vld [vmem:[%s1681 + $0x28] sm:$0xf]
        %v1693 = vld [vmem:[%s1681 + $0x2c] sm:$0xf]
        %v1694 = vshrl.u32 %v1664, 16
        %v1696 = vrot.slane %v1694, 7
        %v1697 = vshrl.u32 %v1666, 16
        %v1699 = vrot.slane %v1697, 7
        %v1700 = vshll.u32 %v1666, 16
        %v1702 = vor.u32 %v1699, %v1700
        %v1703 = vsel %vm1297, %v1696, %v1702
        %v1704 = vshrl.u32 %v1668, 16
        %v1706 = vrot.slane %v1704, 7
        %v1707 = vshll.u32 %v1668, 16
        %v1709 = vor.u32 %v1706, %v1707
        %v1710 = vsel %vm1297, %v1699, %v1709
        %v1711 = vshrl.u32 %v1670, 16
        %v1713 = vrot.slane %v1711, 7
        %v1714 = vshll.u32 %v1670, 16
        %v1716 = vor.u32 %v1713, %v1714
        %v1717 = vsel %vm1297, %v1706, %v1716
        %v1718 = vshrl.u32 %v1672, 16
        %v1720 = vrot.slane %v1718, 7
        %v1721 = vshll.u32 %v1672, 16
        %v1723 = vor.u32 %v1720, %v1721
        %v1724 = vsel %vm1297, %v1713, %v1723
        %v1725 = vshrl.u32 %v1674, 16
        %v1727 = vrot.slane %v1725, 7
        %v1728 = vshll.u32 %v1674, 16
        %v1730 = vor.u32 %v1727, %v1728
        %v1731 = vsel %vm1297, %v1720, %v1730
        %v1732 = vshrl.u32 %v1676, 16
        %v1734 = vrot.slane %v1732, 7
        %v1735 = vshll.u32 %v1676, 16
        %v1737 = vor.u32 %v1734, %v1735
        %v1738 = vsel %vm1297, %v1727, %v1737
        %v1739 = vshrl.u32 %v1678, 16
        %v1741 = vrot.slane %v1739, 7
        %v1742 = vshll.u32 %v1678, 16
        %v1744 = vor.u32 %v1741, %v1742
        %v1745 = vsel %vm1297, %v1734, %v1744
        %v1746 = vshrl.u32 %v1680, 16
        %v1748 = vrot.slane %v1746, 7
        %v1749 = vshll.u32 %v1680, 16
        %v1751 = vor.u32 %v1748, %v1749
        %v1752 = vsel %vm1297, %v1741, %v1751
        %v1765 = vunpack.c.l.b16 %v1682
        %v1766 = vunpack.c.l.b16 %v1683
        %v1767 = vunpack.c.l.b16 %v1684
        %v1768 = vunpack.c.l.b16 %v1685
        %v1769 = vunpack.c.l.b16 %v1686
        %v1770 = vunpack.c.l.b16 %v1687
        %v1771 = vunpack.c.l.b16 %v1688
        %v1772 = vunpack.c.l.b16 %v1689
        %v1773 = vunpack.c.l.b16 %v1690
        %v1774 = vunpack.c.l.b16 %v1691
        %v1775 = vunpack.c.l.b16 %v1692
        %v1776 = vunpack.c.l.b16 %v1693
        %v1777 = vpack.c.b16 %v1766, %v1765
        %v1778 = vpack.c.b16 %v1768, %v1767
        %v1779 = vpack.c.b16 %v1770, %v1769
        %v1780 = vpack.c.b16 %v1772, %v1771
        %v1781 = vpack.c.b16 %v1774, %v1773
        %v1782 = vpack.c.b16 %v1776, %v1775
        %vm1789 = vcmask 785408
        %v1791 = vsel %vm1789, %v1703, 0
        %v1794 = vsel %vm1789, %v1710, 0
        %v1797 = vsel %vm1789, %v1717, 0
        %v1800 = vsel %vm1789, %v1724, 0
        %v1803 = vsel %vm1789, %v1731, 0
        %v1806 = vsel %vm1789, %v1738, 0
        %v1809 = vsel %vm1789, %v1745, 0
        %v1812 = vsel %vm1789, %v1752, 0
        %1814 = vmatprep.subr.bf16.mxu0 0
        %1815 = vmatpush1.bf16.msra.mxu0 %v1777
        %1816 = vmatprep.subr.bf16.mxu0 0
        %1817 = vmatpush1.bf16.msra.mxu0 %v1778
        %1818 = vmatprep.subr.bf16.mxu0 0
        %1819 = vmatpush1.bf16.msra.mxu0 %v1779
        %1820 = vmatprep.subr.bf16.mxu0 0
        %1821 = vmatpush1.bf16.msra.mxu0 %v1780
        %1822 = vmatprep.subr.bf16.mxu0 0
        %1823 = vmatpush1.bf16.msra.mxu0 %v1781
        %1824 = vmatprep.subr.bf16.mxu0 0
        %1825 = vmatpush1.bf16.msra.mxu0 %v1782
        %1826 = vmatprep.subr.bf16.mxu0 0
        %1827 = vmatpush1.bf16.msra.mxu0 0
        %1828 = vmatprep.subr.bf16.mxu0 0
        %1829 = vmatpush1.bf16.msra.mxu0 0
        %1830 = vmatprep.subr.bf16.mxu0 0
        %1831 = vmatpush1.bf16.msra.mxu0 0
        %1832 = vmatprep.subr.bf16.mxu0 0
        %1833 = vmatpush1.bf16.msra.mxu0 0
        %1834 = vmatprep.subr.bf16.mxu0 0
        %1835 = vmatpush1.bf16.msra.mxu0 0
        %1836 = vmatprep.subr.bf16.mxu0 0
        %1837 = vmatpush1.bf16.msra.mxu0 0
        %1838 = vmatprep.subr.bf16.mxu0 0
        %1839 = vmatpush1.bf16.msra.mxu0 0
        %1840 = vmatprep.subr.bf16.mxu0 0
        %1841 = vmatpush1.bf16.msra.mxu0 0
        %1842 = vmatprep.subr.bf16.mxu0 0
        %1843 = vmatpush1.bf16.msra.mxu0 0
        %1844 = vmatprep.subr.bf16.mxu0 0
        %1845 = vmatpush1.bf16.msra.mxu0 0
        %1846 = vmatprep.mubr.bf16.mxu0 0
        %1847 = vmatmul.mubr.bf16.gmra.mrb[0].mxu0 %v1791
        %v1848 = vpop.f32.mrb[0].mxu0
        %v1849 = vadd.f32 0.0, %v1848
        %v1850 = vpop.f32.mrb[0].mxu0
        %v1851 = vpop.f32.mrb[0].mxu0
        %v1852 = vadd.f32 0.0, %v1851
        %v1853 = vpop.f32.mrb[0].mxu0
        %1854 = vmatprep.mubr.bf16.mxu0 0
        %1855 = vmatmul.mubr.bf16.gmra.mrb[0].mxu0 %v1794
        %v1856 = vpop.f32.mrb[0].mxu0
        %v1857 = vadd.f32 0.0, %v1856
        %v1858 = vpop.f32.mrb[0].mxu0
        %v1859 = vpop.f32.mrb[0].mxu0
        %v1860 = vadd.f32 0.0, %v1859
        %v1861 = vpop.f32.mrb[0].mxu0
        %1862 = vmatprep.mubr.bf16.mxu0 0
        %1863 = vmatmul.mubr.bf16.gmra.mrb[0].mxu0 %v1797
        %v1864 = vpop.f32.mrb[0].mxu0
        %v1865 = vadd.f32 0.0, %v1864
        %v1866 = vpop.f32.mrb[0].mxu0
        %v1867 = vpop.f32.mrb[0].mxu0
        %v1868 = vadd.f32 0.0, %v1867
        %v1869 = vpop.f32.mrb[0].mxu0
        %1870 = vmatprep.mubr.bf16.mxu0 0
        %1871 = vmatmul.mubr.bf16.gmra.mrb[0].mxu0 %v1800
        %v1872 = vpop.f32.mrb[0].mxu0
        %v1873 = vadd.f32 0.0, %v1872
        %v1874 = vpop.f32.mrb[0].mxu0
        %v1875 = vpop.f32.mrb[0].mxu0
        %v1876 = vadd.f32 0.0, %v1875
        %v1877 = vpop.f32.mrb[0].mxu0
        %1878 = vmatprep.mubr.bf16.mxu0 0
        %1879 = vmatmul.mubr.bf16.gmra.mrb[0].mxu0 %v1803
        %v1880 = vpop.f32.mrb[0].mxu0
        %v1881 = vadd.f32 0.0, %v1880
        %v1882 = vpop.f32.mrb[0].mxu0
        %v1883 = vpop.f32.mrb[0].mxu0
        %v1884 = vadd.f32 0.0, %v1883
        %v1885 = vpop.f32.mrb[0].mxu0
        %1886 = vmatprep.mubr.bf16.mxu0 0
        %1887 = vmatmul.mubr.bf16.gmra.mrb[0].mxu0 %v1806
        %v1888 = vpop.f32.mrb[0].mxu0
        %v1889 = vadd.f32 0.0, %v1888
        %v1890 = vpop.f32.mrb[0].mxu0
        %v1891 = vpop.f32.mrb[0].mxu0
        %v1892 = vadd.f32 0.0, %v1891
        %v1893 = vpop.f32.mrb[0].mxu0
        %1894 = vmatprep.mubr.bf16.mxu0 0
        %1895 = vmatmul.mubr.bf16.gmra.mrb[0].mxu0 %v1809
        %v1896 = vpop.f32.mrb[0].mxu0
        %v1897 = vadd.f32 0.0, %v1896
        %v1898 = vpop.f32.mrb[0].mxu0
        %v1899 = vpop.f32.mrb[0].mxu0
        %v1900 = vadd.f32 0.0, %v1899
        %v1901 = vpop.f32.mrb[0].mxu0
        %1902 = vmatprep.mubr.bf16.mxu0 0
        %1903 = vmatmul.mubr.bf16.gmra.mrb[0].mxu0 %v1812
        %v1904 = vpop.f32.mrb[0].mxu0
        %v1905 = vadd.f32 0.0, %v1904
        %v1906 = vpop.f32.mrb[0].mxu0
        %v1907 = vpop.f32.mrb[0].mxu0
        %v1908 = vadd.f32 0.0, %v1907
        %v1909 = vpop.f32.mrb[0].mxu0
        %1910 = vdwg.mxu0
        %v1911 = vshrl.u32 %v1534, 16
        %v1913 = vrot.slane %v1911, 7
        %v1914 = vshrl.u32 %v1536, 16
        %v1916 = vrot.slane %v1914, 7
        %v1917 = vshll.u32 %v1536, 16
        %v1919 = vor.u32 %v1916, %v1917
        %v1920 = vsel %vm1297, %v1913, %v1919
        %v1921 = vshrl.u32 %v1538, 16
        %v1923 = vrot.slane %v1921, 7
        %v1924 = vshll.u32 %v1538, 16
        %v1926 = vor.u32 %v1923, %v1924
        %v1927 = vsel %vm1297, %v1916, %v1926
        %v1928 = vshrl.u32 %v1540, 16
        %v1930 = vrot.slane %v1928, 7
        %v1931 = vshll.u32 %v1540, 16
        %v1933 = vor.u32 %v1930, %v1931
        %v1934 = vsel %vm1297, %v1923, %v1933
        %v1935 = vshrl.u32 %v1542, 16
        %v1937 = vrot.slane %v1935, 7
        %v1938 = vshll.u32 %v1542, 16
        %v1940 = vor.u32 %v1937, %v1938
        %v1941 = vsel %vm1297, %v1930, %v1940
        %v1942 = vshrl.u32 %v1544, 16
        %v1944 = vrot.slane %v1942, 7
        %v1945 = vshll.u32 %v1544, 16
        %v1947 = vor.u32 %v1944, %v1945
        %v1948 = vsel %vm1297, %v1937, %v1947
        %v1949 = vshrl.u32 %v1546, 16
        %v1951 = vrot.slane %v1949, 7
        %v1952 = vshll.u32 %v1546, 16
        %v1954 = vor.u32 %v1951, %v1952
        %v1955 = vsel %vm1297, %v1944, %v1954
        %v1956 = vshrl.u32 %v1548, 16
        %v1958 = vrot.slane %v1956, 7
        %v1959 = vshll.u32 %v1548, 16
        %v1961 = vor.u32 %v1958, %v1959
        %v1962 = vsel %vm1297, %v1951, %v1961
        %v1963 = vshrl.u32 %v1550, 16
        %v1965 = vrot.slane %v1963, 7
        %v1966 = vshll.u32 %v1550, 16
        %v1968 = vor.u32 %v1965, %v1966
        %v1969 = vsel %vm1297, %v1958, %v1968
        %v1982 = vunpack.c.l.b16 %v1551
        %v1983 = vunpack.c.l.b16 %v1552
        %v1984 = vunpack.c.l.b16 %v1553
        %v1985 = vunpack.c.l.b16 %v1554
        %v1986 = vunpack.c.l.b16 %v1555
        %v1987 = vunpack.c.l.b16 %v1556
        %v1988 = vunpack.c.l.b16 %v1557
        %v1989 = vunpack.c.l.b16 %v1558
        %v1990 = vunpack.c.l.b16 %v1559
        %v1991 = vunpack.c.l.b16 %v1560
        %v1992 = vunpack.c.l.b16 %v1561
        %v1993 = vunpack.c.l.b16 %v1562
        %v1994 = vpack.c.b16 %v1983, %v1982
        %v1995 = vpack.c.b16 %v1985, %v1984
        %v1996 = vpack.c.b16 %v1987, %v1986
        %v1997 = vpack.c.b16 %v1989, %v1988
        %v1998 = vpack.c.b16 %v1991, %v1990
        %v1999 = vpack.c.b16 %v1993, %v1992
        %v2007 = vsel %vm1789, %v1920, 0
        %v2010 = vsel %vm1789, %v1927, 0
        %v2013 = vsel %vm1789, %v1934, 0
        %v2016 = vsel %vm1789, %v1941, 0
        %v2019 = vsel %vm1789, %v1948, 0
        %v2022 = vsel %vm1789, %v1955, 0
        %v2025 = vsel %vm1789, %v1962, 0
        %v2028 = vsel %vm1789, %v1969, 0
        %2030 = vmatprep.subr.bf16.mxu0 0
        %2031 = vmatpush1.bf16.msra.mxu0 %v1994
        %2032 = vmatprep.subr.bf16.mxu0 0
        %2033 = vmatpush1.bf16.msra.mxu0 %v1995
        %2034 = vmatprep.subr.bf16.mxu0 0
        %2035 = vmatpush1.bf16.msra.mxu0 %v1996
        %2036 = vmatprep.subr.bf16.mxu0 0
        %2037 = vmatpush1.bf16.msra.mxu0 %v1997
        %2038 = vmatprep.subr.bf16.mxu0 0
        %2039 = vmatpush1.bf16.msra.mxu0 %v1998
        %2040 = vmatprep.subr.bf16.mxu0 0
        %2041 = vmatpush1.bf16.msra.mxu0 %v1999
        %2042 = vmatprep.subr.bf16.mxu0 0
        %2043 = vmatpush1.bf16.msra.mxu0 0
        %2044 = vmatprep.subr.bf16.mxu0 0
        %2045 = vmatpush1.bf16.msra.mxu0 0
        %2046 = vmatprep.subr.bf16.mxu0 0
        %2047 = vmatpush1.bf16.msra.mxu0 0
        %2048 = vmatprep.subr.bf16.mxu0 0
        %2049 = vmatpush1.bf16.msra.mxu0 0
        %2050 = vmatprep.subr.bf16.mxu0 0
        %2051 = vmatpush1.bf16.msra.mxu0 0
        %2052 = vmatprep.subr.bf16.mxu0 0
        %2053 = vmatpush1.bf16.msra.mxu0 0
        %2054 = vmatprep.subr.bf16.mxu0 0
        %2055 = vmatpush1.bf16.msra.mxu0 0
        %2056 = vmatprep.subr.bf16.mxu0 0
        %2057 = vmatpush1.bf16.msra.mxu0 0
        %2058 = vmatprep.subr.bf16.mxu0 0
        %2059 = vmatpush1.bf16.msra.mxu0 0
        %2060 = vmatprep.subr.bf16.mxu0 0
        %2061 = vmatpush1.bf16.msra.mxu0 0
        %2062 = vmatprep.mubr.bf16.mxu0 0
        %2063 = vmatmul.mubr.bf16.gmra.mrb[0].mxu0 %v2007
        %v2064 = vpop.f32.mrb[0].mxu0
        %v2065 = vadd.f32 %v1849, %v2064
        %v2066 = vpop.f32.mrb[0].mxu0
        %v2067 = vpop.f32.mrb[0].mxu0
        %v2068 = vadd.f32 %v1852, %v2067
        %v2069 = vpop.f32.mrb[0].mxu0
        %2070 = vmatprep.mubr.bf16.mxu0 0
        %2071 = vmatmul.mubr.bf16.gmra.mrb[0].mxu0 %v2010
        %v2072 = vpop.f32.mrb[0].mxu0
        %v2073 = vadd.f32 %v1857, %v2072
        %v2074 = vpop.f32.mrb[0].mxu0
        %v2075 = vpop.f32.mrb[0].mxu0
        %v2076 = vadd.f32 %v1860, %v2075
        %v2077 = vpop.f32.mrb[0].mxu0
        %2078 = vmatprep.mubr.bf16.mxu0 0
        %2079 = vmatmul.mubr.bf16.gmra.mrb[0].mxu0 %v2013
        %v2080 = vpop.f32.mrb[0].mxu0
        %v2081 = vadd.f32 %v1865, %v2080
        %v2082 = vpop.f32.mrb[0].mxu0
        %v2083 = vpop.f32.mrb[0].mxu0
        %v2084 = vadd.f32 %v1868, %v2083
        %v2085 = vpop.f32.mrb[0].mxu0
        %2086 = vmatprep.mubr.bf16.mxu0 0
        %2087 = vmatmul.mubr.bf16.gmra.mrb[0].mxu0 %v2016
        %v2088 = vpop.f32.mrb[0].mxu0
        %v2089 = vadd.f32 %v1873, %v2088
        %v2090 = vpop.f32.mrb[0].mxu0
        %v2091 = vpop.f32.mrb[0].mxu0
        %v2092 = vadd.f32 %v1876, %v2091
        %v2093 = vpop.f32.mrb[0].mxu0
        %2094 = vmatprep.mubr.bf16.mxu0 0
        %2095 = vmatmul.mubr.bf16.gmra.mrb[0].mxu0 %v2019
        %v2096 = vpop.f32.mrb[0].mxu0
        %v2097 = vadd.f32 %v1881, %v2096
        %v2098 = vpop.f32.mrb[0].mxu0
        %v2099 = vpop.f32.mrb[0].mxu0
        %v2100 = vadd.f32 %v1884, %v2099
        %v2101 = vpop.f32.mrb[0].mxu0
        %2102 = vmatprep.mubr.bf16.mxu0 0
        %2103 = vmatmul.mubr.bf16.gmra.mrb[0].mxu0 %v2022
        %v2104 = vpop.f32.mrb[0].mxu0
        %v2105 = vadd.f32 %v1889, %v2104
        %v2106 = vpop.f32.mrb[0].mxu0
        %v2107 = vpop.f32.mrb[0].mxu0
        %v2108 = vadd.f32 %v1892, %v2107
        %v2109 = vpop.f32.mrb[0].mxu0
        %2110 = vmatprep.mubr.bf16.mxu0 0
        %2111 = vmatmul.mubr.bf16.gmra.mrb[0].mxu0 %v2025
        %v2112 = vpop.f32.mrb[0].mxu0
        %v2113 = vadd.f32 %v1897, %v2112
        %v2114 = vpop.f32.mrb[0].mxu0
        %v2115 = vpop.f32.mrb[0].mxu0
        %v2116 = vadd.f32 %v1900, %v2115
        %v2117 = vpop.f32.mrb[0].mxu0
        %2118 = vmatprep.mubr.bf16.mxu0 0
        %2119 = vmatmul.mubr.bf16.gmra.mrb[0].mxu0 %v2028
        %v2120 = vpop.f32.mrb[0].mxu0
        %v2121 = vadd.f32 %v1905, %v2120
        %v2122 = vpop.f32.mrb[0].mxu0
        %v2123 = vpop.f32.mrb[0].mxu0
        %v2124 = vadd.f32 %v1908, %v2123
        %v2125 = vpop.f32.mrb[0].mxu0
        %2126 = vdwg.mxu0
        %v2127 = vld [vmem:[#allocation2 + $0x10] sm:$0x80]
        %v2128 = vld [vmem:[#allocation2 + $0x50] sm:$0xff]
        %v2129 = vld [vmem:[#allocation2 + $0x18] sm:$0xff]
        %v2130 = vld [vmem:[#allocation2 + $0x20] sm:$0xff]
        %v2131 = vld [vmem:[#allocation2 + $0x28] sm:$0xff]
        %v2132 = vld [vmem:[#allocation2 + $0x30] sm:$0xff]
        %v2133 = vld [vmem:[#allocation2 + $0x38] sm:$0xff]
        %v2134 = vld [vmem:[#allocation2 + $0x40] sm:$0xff]
        %v2135 = vld [vmem:[#allocation2 + $0x48] sm:$0xff]
        %v2136 = vld [vmem:[#allocation2 + $0x58] sm:$0x1]
        %v2137 = vsel %vm1191, %v2127, 0
        %v2138 = vsel %vm1192, %v1032, 0
        %v2139 = vsel %vm1193, %v1033, 0
        %v2140 = vsel %vm1194, %v1034, 0
        %v2141 = vsel %vm1195, %v1035, 0
        %v2142 = vsel %vm1196, %v1036, 0
        %v2143 = vsel %vm1197, %v1037, 0
        %v2144 = vsel %vm1198, %v1564, 0
        %v2145 = vsel %vm1199, %v2128, 0
        %v2146 = vsel %vm1361, %v2129, 0
        %v2147 = vsel %vm1362, %v2130, 0
        %v2148 = vsel %vm1363, %v2131, 0
        %v2149 = vsel %vm1364, %v2132, 0
        %v2150 = vsel %vm1365, %v2133, 0
        %v2151 = vsel %vm1366, %v2134, 0
        %v2152 = vsel %vm1367, %v2135, 0
        %v2153 = vsel %vm1368, %v2128, 0
        %v2154 = vsel %vm1369, %v2136, 0
        %v2156 = vshll.u32 %v2128, 16
        %v2158 = vrot.slane %v2156, 1
        %v2159 = vsel %vm1127, %v1591, %v2158
        %v2160 = vshrl.u32 %v2128, 16
        %v2162 = vor.u32 %v2160, %v2158
        %2163 = vrot.lane.b32.xlu0 %v1397, 32
        %v2164 = vpop.permute.xlu0 %2163
        %2165 = vrot.lane.b32.xlu0 %v2159, 32
        %v2166 = vpop.permute.xlu0 %2165
        %2167 = vrot.lane.b32.xlu0 %v2162, 32
        %v2168 = vpop.permute.xlu0 %2167
        %v2178 = vrot.slane %v2146, 1
        %v2179 = vrot.slane %v2147, 1
        %v2180 = vsel %vm1469, %v2178, %v2179
        %v2181 = vrot.slane %v2148, 1
        %v2182 = vsel %vm1469, %v2179, %v2181
        %v2183 = vrot.slane %v2149, 1
        %v2184 = vsel %vm1469, %v2181, %v2183
        %v2185 = vrot.slane %v2150, 1
        %v2186 = vsel %vm1469, %v2183, %v2185
        %v2187 = vrot.slane %v2151, 1
        %v2188 = vsel %vm1469, %v2185, %v2187
        %v2189 = vrot.slane %v2152, 1
        %v2190 = vsel %vm1469, %v2187, %v2189
        %v2191 = vrot.slane %v2153, 1
        %v2192 = vsel %vm1469, %v2189, %v2191
        %v2193 = vrot.slane %v2154, 1
        %v2194 = vsel %vm1469, %v2191, %v2193
        %2195 = vrot.lane.b32.xlu0 %v2178, 64
        %v2196 = vpop.permute.xlu0 %2195
        %2197 = vrot.lane.b32.xlu0 %v2180, 64
        %v2198 = vpop.permute.xlu0 %2197
        %2199 = vrot.lane.b32.xlu0 %v2182, 64
        %v2200 = vpop.permute.xlu0 %2199
        %2201 = vrot.lane.b32.xlu0 %v2184, 64
        %v2202 = vpop.permute.xlu0 %2201
        %2203 = vrot.lane.b32.xlu0 %v2186, 64
        %v2204 = vpop.permute.xlu0 %2203
        %2205 = vrot.lane.b32.xlu0 %v2188, 64
        %v2206 = vpop.permute.xlu0 %2205
        %2207 = vrot.lane.b32.xlu0 %v2190, 64
        %v2208 = vpop.permute.xlu0 %2207
        %2209 = vrot.lane.b32.xlu0 %v2192, 64
        %v2210 = vpop.permute.xlu0 %2209
        %2211 = vrot.lane.b32.xlu0 %v2194, 64
        %v2212 = vpop.permute.xlu0 %2211
        %v2215 = vsel %vm794, %v2137, %v2164
        %v2217 = vsel %vm794, %v2138, %v1449
        %v2219 = vsel %vm794, %v2139, %v1451
        %v2221 = vsel %vm794, %v2140, %v1453
        %v2223 = vsel %vm794, %v2141, %v1455
        %v2225 = vsel %vm794, %v2142, %v1457
        %v2227 = vsel %vm794, %v2143, %v1595
        %v2230 = vsel %vm794, %v2144, %v2166
        %v2233 = vsel %vm794, %v2145, %v2168
        %v2235 = vsel %vm1532, %v2215, %v2196
        %v2237 = vsel %vm1532, %v2217, %v2198
        %v2239 = vsel %vm1532, %v2219, %v2200
        %v2241 = vsel %vm1532, %v2221, %v2202
        %v2243 = vsel %vm1532, %v2223, %v2204
        %v2245 = vsel %vm1532, %v2225, %v2206
        %v2247 = vsel %vm1532, %v2227, %v2208
        %v2249 = vsel %vm1532, %v2230, %v2210
        %v2251 = vsel %vm1532, %v2233, %v2212
        %s2252 = scalar_lea.vmem %s3, 96
        %v2253 = vld [vmem:[%s2252] sm:$0xf]
        %v2254 = vld [vmem:[%s2252 + $0x4] sm:$0xf]
        %v2255 = vld [vmem:[%s2252 + $0x8] sm:$0xf]
        %v2256 = vld [vmem:[%s2252 + $0xc] sm:$0xf]
        %v2257 = vld [vmem:[%s2252 + $0x10] sm:$0xf]
        %v2258 = vld [vmem:[%s2252 + $0x14] sm:$0xf]
        %v2259 = vld [vmem:[%s2252 + $0x18] sm:$0xf]
        %v2260 = vld [vmem:[%s2252 + $0x1c] sm:$0xf]
        %v2261 = vld [vmem:[%s2252 + $0x20] sm:$0xf]
        %v2262 = vld [vmem:[%s2252 + $0x24] sm:$0xf]
        %v2263 = vld [vmem:[%s2252 + $0x28] sm:$0xf]
        %v2264 = vld [vmem:[%s2252 + $0x2c] sm:$0xf]
        %v2265 = vshrl.u32 %v2235, 16
        %v2267 = vrot.slane %v2265, 7
        %v2268 = vshrl.u32 %v2237, 16
        %v2270 = vrot.slane %v2268, 7
        %v2271 = vshll.u32 %v2237, 16
        %v2273 = vor.u32 %v2270, %v2271
        %v2274 = vsel %vm1297, %v2267, %v2273
        %v2275 = vshrl.u32 %v2239, 16
        %v2277 = vrot.slane %v2275, 7
        %v2278 = vshll.u32 %v2239, 16
        %v2280 = vor.u32 %v2277, %v2278
        %v2281 = vsel %vm1297, %v2270, %v2280
        %v2282 = vshrl.u32 %v2241, 16
        %v2284 = vrot.slane %v2282, 7
        %v2285 = vshll.u32 %v2241, 16
        %v2287 = vor.u32 %v2284, %v2285
        %v2288 = vsel %vm1297, %v2277, %v2287
        %v2289 = vshrl.u32 %v2243, 16
        %v2291 = vrot.slane %v2289, 7
        %v2292 = vshll.u32 %v2243, 16
        %v2294 = vor.u32 %v2291, %v2292
        %v2295 = vsel %vm1297, %v2284, %v2294
        %v2296 = vshrl.u32 %v2245, 16
        %v2298 = vrot.slane %v2296, 7
        %v2299 = vshll.u32 %v2245, 16
        %v2301 = vor.u32 %v2298, %v2299
        %v2302 = vsel %vm1297, %v2291, %v2301
        %v2303 = vshrl.u32 %v2247, 16
        %v2305 = vrot.slane %v2303, 7
        %v2306 = vshll.u32 %v2247, 16
        %v2308 = vor.u32 %v2305, %v2306
        %v2309 = vsel %vm1297, %v2298, %v2308
        %v2310 = vshrl.u32 %v2249, 16
        %v2312 = vrot.slane %v2310, 7
        %v2313 = vshll.u32 %v2249, 16
        %v2315 = vor.u32 %v2312, %v2313
        %v2316 = vsel %vm1297, %v2305, %v2315
        %v2317 = vshrl.u32 %v2251, 16
        %v2319 = vrot.slane %v2317, 7
        %v2320 = vshll.u32 %v2251, 16
        %v2322 = vor.u32 %v2319, %v2320
        %v2323 = vsel %vm1297, %v2312, %v2322
        %v2336 = vunpack.c.l.b16 %v2253
        %v2337 = vunpack.c.l.b16 %v2254
        %v2338 = vunpack.c.l.b16 %v2255
        %v2339 = vunpack.c.l.b16 %v2256
        %v2340 = vunpack.c.l.b16 %v2257
        %v2341 = vunpack.c.l.b16 %v2258
        %v2342 = vunpack.c.l.b16 %v2259
        %v2343 = vunpack.c.l.b16 %v2260
        %v2344 = vunpack.c.l.b16 %v2261
        %v2345 = vunpack.c.l.b16 %v2262
        %v2346 = vunpack.c.l.b16 %v2263
        %v2347 = vunpack.c.l.b16 %v2264
        %v2348 = vpack.c.b16 %v2337, %v2336
        %v2349 = vpack.c.b16 %v2339, %v2338
        %v2350 = vpack.c.b16 %v2341, %v2340
        %v2351 = vpack.c.b16 %v2343, %v2342
        %v2352 = vpack.c.b16 %v2345, %v2344
        %v2353 = vpack.c.b16 %v2347, %v2346
        %v2361 = vsel %vm1789, %v2274, 0
        %v2364 = vsel %vm1789, %v2281, 0
        %v2367 = vsel %vm1789, %v2288, 0
        %v2370 = vsel %vm1789, %v2295, 0
        %v2373 = vsel %vm1789, %v2302, 0
        %v2376 = vsel %vm1789, %v2309, 0
        %v2379 = vsel %vm1789, %v2316, 0
        %v2382 = vsel %vm1789, %v2323, 0
        %2384 = vmatprep.subr.bf16.mxu0 0
        %2385 = vmatpush1.bf16.msra.mxu0 %v2348
        %2386 = vmatprep.subr.bf16.mxu0 0
        %2387 = vmatpush1.bf16.msra.mxu0 %v2349
        %2388 = vmatprep.subr.bf16.mxu0 0
        %2389 = vmatpush1.bf16.msra.mxu0 %v2350
        %2390 = vmatprep.subr.bf16.mxu0 0
        %2391 = vmatpush1.bf16.msra.mxu0 %v2351
        %2392 = vmatprep.subr.bf16.mxu0 0
        %2393 = vmatpush1.bf16.msra.mxu0 %v2352
        %2394 = vmatprep.subr.bf16.mxu0 0
        %2395 = vmatpush1.bf16.msra.mxu0 %v2353
        %2396 = vmatprep.subr.bf16.mxu0 0
        %2397 = vmatpush1.bf16.msra.mxu0 0
        %2398 = vmatprep.subr.bf16.mxu0 0
        %2399 = vmatpush1.bf16.msra.mxu0 0
        %2400 = vmatprep.subr.bf16.mxu0 0
        %2401 = vmatpush1.bf16.msra.mxu0 0
        %2402 = vmatprep.subr.bf16.mxu0 0
        %2403 = vmatpush1.bf16.msra.mxu0 0
        %2404 = vmatprep.subr.bf16.mxu0 0
        %2405 = vmatpush1.bf16.msra.mxu0 0
        %2406 = vmatprep.subr.bf16.mxu0 0
        %2407 = vmatpush1.bf16.msra.mxu0 0
        %2408 = vmatprep.subr.bf16.mxu0 0
        %2409 = vmatpush1.bf16.msra.mxu0 0
        %2410 = vmatprep.subr.bf16.mxu0 0
        %2411 = vmatpush1.bf16.msra.mxu0 0
        %2412 = vmatprep.subr.bf16.mxu0 0
        %2413 = vmatpush1.bf16.msra.mxu0 0
        %2414 = vmatprep.subr.bf16.mxu0 0
        %2415 = vmatpush1.bf16.msra.mxu0 0
        %2416 = vmatprep.mubr.bf16.mxu0 0
        %2417 = vmatmul.mubr.bf16.gmra.mrb[0].mxu0 %v2361
        %v2418 = vpop.f32.mrb[0].mxu0
        %v2419 = vadd.f32 0.0, %v2418
        %v2420 = vpop.f32.mrb[0].mxu0
        %v2421 = vpop.f32.mrb[0].mxu0
        %v2422 = vadd.f32 0.0, %v2421
        %v2423 = vpop.f32.mrb[0].mxu0
        %2424 = vmatprep.mubr.bf16.mxu0 0
        %2425 = vmatmul.mubr.bf16.gmra.mrb[0].mxu0 %v2364
        %v2426 = vpop.f32.mrb[0].mxu0
        %v2427 = vadd.f32 0.0, %v2426
        %v2428 = vpop.f32.mrb[0].mxu0
        %v2429 = vpop.f32.mrb[0].mxu0
        %v2430 = vadd.f32 0.0, %v2429
        %v2431 = vpop.f32.mrb[0].mxu0
        %2432 = vmatprep.mubr.bf16.mxu0 0
        %2433 = vmatmul.mubr.bf16.gmra.mrb[0].mxu0 %v2367
        %v2434 = vpop.f32.mrb[0].mxu0
        %v2435 = vadd.f32 0.0, %v2434
        %v2436 = vpop.f32.mrb[0].mxu0
        %v2437 = vpop.f32.mrb[0].mxu0
        %v2438 = vadd.f32 0.0, %v2437
        %v2439 = vpop.f32.mrb[0].mxu0
        %2440 = vmatprep.mubr.bf16.mxu0 0
        %2441 = vmatmul.mubr.bf16.gmra.mrb[0].mxu0 %v2370
        %v2442 = vpop.f32.mrb[0].mxu0
        %v2443 = vadd.f32 0.0, %v2442
        %v2444 = vpop.f32.mrb[0].mxu0
        %v2445 = vpop.f32.mrb[0].mxu0
        %v2446 = vadd.f32 0.0, %v2445
        %v2447 = vpop.f32.mrb[0].mxu0
        %2448 = vmatprep.mubr.bf16.mxu0 0
        %2449 = vmatmul.mubr.bf16.gmra.mrb[0].mxu0 %v2373
        %v2450 = vpop.f32.mrb[0].mxu0
        %v2451 = vadd.f32 0.0, %v2450
        %v2452 = vpop.f32.mrb[0].mxu0
        %v2453 = vpop.f32.mrb[0].mxu0
        %v2454 = vadd.f32 0.0, %v2453
        %v2455 = vpop.f32.mrb[0].mxu0
        %2456 = vmatprep.mubr.bf16.mxu0 0
        %2457 = vmatmul.mubr.bf16.gmra.mrb[0].mxu0 %v2376
        %v2458 = vpop.f32.mrb[0].mxu0
        %v2459 = vadd.f32 0.0, %v2458
        %v2460 = vpop.f32.mrb[0].mxu0
        %v2461 = vpop.f32.mrb[0].mxu0
        %v2462 = vadd.f32 0.0, %v2461
        %v2463 = vpop.f32.mrb[0].mxu0
        %2464 = vmatprep.mubr.bf16.mxu0 0
        %2465 = vmatmul.mubr.bf16.gmra.mrb[0].mxu0 %v2379
        %v2466 = vpop.f32.mrb[0].mxu0
        %v2467 = vadd.f32 0.0, %v2466
        %v2468 = vpop.f32.mrb[0].mxu0
        %v2469 = vpop.f32.mrb[0].mxu0
        %v2470 = vadd.f32 0.0, %v2469
        %v2471 = vpop.f32.mrb[0].mxu0
        %2472 = vmatprep.mubr.bf16.mxu0 0
        %2473 = vmatmul.mubr.bf16.gmra.mrb[0].mxu0 %v2382
        %v2474 = vpop.f32.mrb[0].mxu0
        %v2475 = vadd.f32 0.0, %v2474
        %v2476 = vpop.f32.mrb[0].mxu0
        %v2477 = vpop.f32.mrb[0].mxu0
        %v2478 = vadd.f32 0.0, %v2477
        %v2479 = vpop.f32.mrb[0].mxu0
        %2480 = vdwg.mxu0
        %v2481 = vadd.f32 %v2065, %v2419
        %v2482 = vadd.f32 %v2068, %v2422
        %v2483 = vadd.f32 %v2073, %v2427
        %v2484 = vadd.f32 %v2076, %v2430
        %v2485 = vadd.f32 %v2081, %v2435
        %v2486 = vadd.f32 %v2084, %v2438
        %v2487 = vadd.f32 %v2089, %v2443
        %v2488 = vadd.f32 %v2092, %v2446
        %v2489 = vadd.f32 %v2097, %v2451
        %v2490 = vadd.f32 %v2100, %v2454
        %v2491 = vadd.f32 %v2105, %v2459
        %v2492 = vadd.f32 %v2108, %v2462
        %v2493 = vadd.f32 %v2113, %v2467
        %v2494 = vadd.f32 %v2116, %v2470
        %v2495 = vadd.f32 %v2121, %v2475
        %v2496 = vadd.f32 %v2124, %v2478
        %v2497 = vld [vmem:[%s4] sm:$0x1]
        %v2499 = vlaneseq
        %v2500 = vshrl.u32 %v2499, 7
        %v2501 = vsub.s32 0, %v2500
        %v2502 = vrot.slane %v2497, %v2501
        %v2504 = vadd.f32 %v2481, %v2502
        %v2505 = vadd.f32 %v2482, %v2502
        %v2506 = vadd.f32 %v2483, %v2502
        %v2507 = vadd.f32 %v2484, %v2502
        %v2508 = vadd.f32 %v2485, %v2502
        %v2509 = vadd.f32 %v2486, %v2502
        %v2510 = vadd.f32 %v2487, %v2502
        %v2511 = vadd.f32 %v2488, %v2502
        %v2512 = vadd.f32 %v2489, %v2502
        %v2513 = vadd.f32 %v2490, %v2502
        %v2514 = vadd.f32 %v2491, %v2502
        %v2515 = vadd.f32 %v2492, %v2502
        %v2516 = vadd.f32 %v2493, %v2502
        %v2517 = vadd.f32 %v2494, %v2502
        %v2518 = vadd.f32 %v2495, %v2502
        %v2519 = vadd.f32 %v2496, %v2502
        %v2520 = vmax.f32 %v2504, 0.0
        %v2521 = vmax.f32 %v2505, 0.0
        %v2522 = vmax.f32 %v2506, 0.0
        %v2523 = vmax.f32 %v2507, 0.0
        %v2524 = vmax.f32 %v2508, 0.0
        %v2525 = vmax.f32 %v2509, 0.0
        %v2526 = vmax.f32 %v2510, 0.0
        %v2527 = vmax.f32 %v2511, 0.0
        %v2528 = vmax.f32 %v2512, 0.0
        %v2529 = vmax.f32 %v2513, 0.0
        %v2530 = vmax.f32 %v2514, 0.0
        %v2531 = vmax.f32 %v2515, 0.0
        %v2532 = vmax.f32 %v2516, 0.0
        %v2533 = vmax.f32 %v2517, 0.0
        %v2534 = vmax.f32 %v2518, 0.0
        %v2535 = vmax.f32 %v2519, 0.0
        %v2536 = vpack.c.bf16 %v2521, %v2520
        %v2537 = vpack.c.bf16 %v2523, %v2522
        %v2538 = vpack.c.bf16 %v2525, %v2524
        %v2539 = vpack.c.bf16 %v2527, %v2526
        %v2540 = vpack.c.bf16 %v2529, %v2528
        %v2541 = vpack.c.bf16 %v2531, %v2530
        %v2542 = vpack.c.bf16 %v2533, %v2532
        %v2543 = vpack.c.bf16 %v2535, %v2534
        %v2544 = vld [vmem:[%s5] sm:$0xf]
        %v2545 = vld [vmem:[%s5 + $0x4] sm:$0xf]
        %v2546 = vld [vmem:[%s5 + $0x8] sm:$0xf]
        %v2547 = vld [vmem:[%s5 + $0xc] sm:$0xf]
        %v2548 = vunpack.c.l.bf16 %v310
        %v2549 = vunpack.c.l.bf16 %v311
        %v2550 = vunpack.c.l.bf16 %v312
        %v2551 = vunpack.c.l.bf16 %v313
        %v2552 = vunpack.c.l.bf16 %v314
        %v2553 = vunpack.c.l.bf16 %v315
        %v2554 = vunpack.c.l.bf16 %v316
        %v2555 = vunpack.c.l.bf16 %v317
        %v2556 = vunpack.c.l.bf16 %v318
        %v2557 = vunpack.c.l.bf16 %v319
        %v2558 = vunpack.c.l.bf16 %v320
        %v2559 = vunpack.c.l.bf16 %v321
        %v2560 = vunpack.c.l.bf16 %v322
        %v2561 = vunpack.c.l.bf16 %v323
        %v2562 = vunpack.c.l.bf16 %v324
        %v2563 = vunpack.c.l.bf16 %v325
        %v2564 = vld [vmem:[%s6] sm:$0x1]
        %v2566 = vlaneseq
        %v2567 = vshrl.u32 %v2566, 7
        %v2568 = vsub.s32 0, %v2567
        %v2569 = vrot.slane %v2564, %v2568
        %v2575 = vunpack.c.l.b16 %v2544
        %v2576 = vunpack.c.l.b16 %v2545
        %v2577 = vunpack.c.l.b16 %v2546
        %v2578 = vunpack.c.l.b16 %v2547
        %v2579 = vpack.c.b16 %v2576, %v2575
        %v2580 = vpack.c.b16 %v2578, %v2577
        %v2584 = vsel %vm794, %v2536, 0
        %v2587 = vsel %vm794, %v2537, 0
        %v2590 = vsel %vm794, %v2538, 0
        %v2593 = vsel %vm794, %v2539, 0
        %v2596 = vsel %vm794, %v2540, 0
        %v2599 = vsel %vm794, %v2541, 0
        %v2602 = vsel %vm794, %v2542, 0
        %v2605 = vsel %vm794, %v2543, 0
        %2607 = vmatprep.subr.bf16.mxu0 0
        %2608 = vmatpush1.bf16.msra.mxu0 %v2579
        %2609 = vmatprep.subr.bf16.mxu0 0
        %2610 = vmatpush1.bf16.msra.mxu0 %v2580
        %2611 = vmatprep.subr.bf16.mxu0 0
        %2612 = vmatpush1.bf16.msra.mxu0 0
        %2613 = vmatprep.subr.bf16.mxu0 0
        %2614 = vmatpush1.bf16.msra.mxu0 0
        %2615 = vmatprep.subr.bf16.mxu0 0
        %2616 = vmatpush1.bf16.msra.mxu0 0
        %2617 = vmatprep.subr.bf16.mxu0 0
        %2618 = vmatpush1.bf16.msra.mxu0 0
        %2619 = vmatprep.subr.bf16.mxu0 0
        %2620 = vmatpush1.bf16.msra.mxu0 0
        %2621 = vmatprep.subr.bf16.mxu0 0
        %2622 = vmatpush1.bf16.msra.mxu0 0
        %2623 = vmatprep.subr.bf16.mxu0 0
        %2624 = vmatpush1.bf16.msra.mxu0 0
        %2625 = vmatprep.subr.bf16.mxu0 0
        %2626 = vmatpush1.bf16.msra.mxu0 0
        %2627 = vmatprep.subr.bf16.mxu0 0
        %2628 = vmatpush1.bf16.msra.mxu0 0
        %2629 = vmatprep.subr.bf16.mxu0 0
        %2630 = vmatpush1.bf16.msra.mxu0 0
        %2631 = vmatprep.subr.bf16.mxu0 0
        %2632 = vmatpush1.bf16.msra.mxu0 0
        %2633 = vmatprep.subr.bf16.mxu0 0
        %2634 = vmatpush1.bf16.msra.mxu0 0
        %2635 = vmatprep.subr.bf16.mxu0 0
        %2636 = vmatpush1.bf16.msra.mxu0 0
        %2637 = vmatprep.subr.bf16.mxu0 0
        %2638 = vmatpush1.bf16.msra.mxu0 0
        %2639 = vmatprep.mubr.bf16.mxu0 0
        %2640 = vmatmul.mubr.bf16.gmra.mrb[0].mxu0 %v2584
        %v2641 = vpop.f32.mrb[0].mxu0
        %v2642 = vadd.f32 %v2569, %v2641
        %v2643 = vpop.f32.mrb[0].mxu0
        %v2644 = vpop.f32.mrb[0].mxu0
        %v2645 = vadd.f32 %v2569, %v2644
        %v2646 = vpop.f32.mrb[0].mxu0
        %2647 = vmatprep.mubr.bf16.mxu0 0
        %2648 = vmatmul.mubr.bf16.gmra.mrb[0].mxu0 %v2587
        %v2649 = vpop.f32.mrb[0].mxu0
        %v2650 = vadd.f32 %v2569, %v2649
        %v2651 = vpop.f32.mrb[0].mxu0
        %v2652 = vpop.f32.mrb[0].mxu0
        %v2653 = vadd.f32 %v2569, %v2652
        %v2654 = vpop.f32.mrb[0].mxu0
        %2655 = vmatprep.mubr.bf16.mxu0 0
        %2656 = vmatmul.mubr.bf16.gmra.mrb[0].mxu0 %v2590
        %v2657 = vpop.f32.mrb[0].mxu0
        %v2658 = vadd.f32 %v2569, %v2657
        %v2659 = vpop.f32.mrb[0].mxu0
        %v2660 = vpop.f32.mrb[0].mxu0
        %v2661 = vadd.f32 %v2569, %v2660
        %v2662 = vpop.f32.mrb[0].mxu0
        %2663 = vmatprep.mubr.bf16.mxu0 0
        %2664 = vmatmul.mubr.bf16.gmra.mrb[0].mxu0 %v2593
        %v2665 = vpop.f32.mrb[0].mxu0
        %v2666 = vadd.f32 %v2569, %v2665
        %v2667 = vpop.f32.mrb[0].mxu0
        %v2668 = vpop.f32.mrb[0].mxu0
        %v2669 = vadd.f32 %v2569, %v2668
        %v2670 = vpop.f32.mrb[0].mxu0
        %2671 = vmatprep.mubr.bf16.mxu0 0
        %2672 = vmatmul.mubr.bf16.gmra.mrb[0].mxu0 %v2596
        %v2673 = vpop.f32.mrb[0].mxu0
        %v2674 = vadd.f32 %v2569, %v2673
        %v2675 = vpop.f32.mrb[0].mxu0
        %v2676 = vpop.f32.mrb[0].mxu0
        %v2677 = vadd.f32 %v2569, %v2676
        %v2678 = vpop.f32.mrb[0].mxu0
        %2679 = vmatprep.mubr.bf16.mxu0 0
        %2680 = vmatmul.mubr.bf16.gmra.mrb[0].mxu0 %v2599
        %v2681 = vpop.f32.mrb[0].mxu0
        %v2682 = vadd.f32 %v2569, %v2681
        %v2683 = vpop.f32.mrb[0].mxu0
        %v2684 = vpop.f32.mrb[0].mxu0
        %v2685 = vadd.f32 %v2569, %v2684
        %v2686 = vpop.f32.mrb[0].mxu0
        %2687 = vmatprep.mubr.bf16.mxu0 0
        %2688 = vmatmul.mubr.bf16.gmra.mrb[0].mxu0 %v2602
        %v2689 = vpop.f32.mrb[0].mxu0
        %v2690 = vadd.f32 %v2569, %v2689
        %v2691 = vpop.f32.mrb[0].mxu0
        %v2692 = vpop.f32.mrb[0].mxu0
        %v2693 = vadd.f32 %v2569, %v2692
        %v2694 = vpop.f32.mrb[0].mxu0
        %2695 = vmatprep.mubr.bf16.mxu0 0
        %2696 = vmatmul.mubr.bf16.gmra.mrb[0].mxu0 %v2605
        %v2697 = vpop.f32.mrb[0].mxu0
        %v2698 = vadd.f32 %v2569, %v2697
        %v2699 = vpop.f32.mrb[0].mxu0
        %v2700 = vpop.f32.mrb[0].mxu0
        %v2701 = vadd.f32 %v2569, %v2700
        %v2702 = vpop.f32.mrb[0].mxu0
        %2703 = vdwg.mxu0
        %v2704 = vadd.f32 %v2642, %v2548
        %v2705 = vadd.f32 %v2645, %v2549
        %v2706 = vadd.f32 %v2650, %v2550
        %v2707 = vadd.f32 %v2653, %v2551
        %v2708 = vadd.f32 %v2658, %v2552
        %v2709 = vadd.f32 %v2661, %v2553
        %v2710 = vadd.f32 %v2666, %v2554
        %v2711 = vadd.f32 %v2669, %v2555
        %v2712 = vadd.f32 %v2674, %v2556
        %v2713 = vadd.f32 %v2677, %v2557
        %v2714 = vadd.f32 %v2682, %v2558
        %v2715 = vadd.f32 %v2685, %v2559
        %v2716 = vadd.f32 %v2690, %v2560
        %v2717 = vadd.f32 %v2693, %v2561
        %v2718 = vadd.f32 %v2698, %v2562
        %v2719 = vadd.f32 %v2701, %v2563
        %v2720 = vmax.f32 %v2704, 0.0
        %v2721 = vmax.f32 %v2705, 0.0
        %v2722 = vmax.f32 %v2706, 0.0
        %v2723 = vmax.f32 %v2707, 0.0
        %v2724 = vmax.f32 %v2708, 0.0
        %v2725 = vmax.f32 %v2709, 0.0
        %v2726 = vmax.f32 %v2710, 0.0
        %v2727 = vmax.f32 %v2711, 0.0
        %v2728 = vmax.f32 %v2712, 0.0
        %v2729 = vmax.f32 %v2713, 0.0
        %v2730 = vmax.f32 %v2714, 0.0
        %v2731 = vmax.f32 %v2715, 0.0
        %v2732 = vmax.f32 %v2716, 0.0
        %v2733 = vmax.f32 %v2717, 0.0
        %v2734 = vmax.f32 %v2718, 0.0
        %v2735 = vmax.f32 %v2719, 0.0
        %v2736 = vpack.c.bf16 %v2721, %v2720
        %v2737 = vpack.c.bf16 %v2723, %v2722
        %v2738 = vpack.c.bf16 %v2725, %v2724
        %v2739 = vpack.c.bf16 %v2727, %v2726
        %v2740 = vpack.c.bf16 %v2729, %v2728
        %v2741 = vpack.c.bf16 %v2731, %v2730
        %v2742 = vpack.c.bf16 %v2733, %v2732
        %v2743 = vpack.c.bf16 %v2735, %v2734
        %v2752 = vunpack.c.l.b16 %v2736
        %v2753 = vunpack.c.h.b16 %v2736
        %v2754 = vunpack.c.l.b16 %v2737
        %v2755 = vunpack.c.h.b16 %v2737
        %v2756 = vunpack.c.l.b16 %v2738
        %v2757 = vunpack.c.h.b16 %v2738
        %v2758 = vunpack.c.l.b16 %v2739
        %v2759 = vunpack.c.h.b16 %v2739
        %v2760 = vunpack.c.l.b16 %v2740
        %v2761 = vunpack.c.h.b16 %v2740
        %v2762 = vunpack.c.l.b16 %v2741
        %v2763 = vunpack.c.h.b16 %v2741
        %v2764 = vunpack.c.l.b16 %v2742
        %v2765 = vunpack.c.h.b16 %v2742
        %v2766 = vunpack.c.l.b16 %v2743
        %v2767 = vunpack.c.h.b16 %v2743
        %v2768 = vpack.c.b16 %v2752, %v2752
        %v2769 = vpack.c.b16 %v2753, %v2753
        %v2770 = vpack.c.b16 %v2754, %v2754
        %v2771 = vpack.c.b16 %v2755, %v2755
        %v2772 = vpack.c.b16 %v2756, %v2756
        %v2773 = vpack.c.b16 %v2757, %v2757
        %v2774 = vpack.c.b16 %v2758, %v2758
        %v2775 = vpack.c.b16 %v2759, %v2759
        %v2776 = vpack.c.b16 %v2760, %v2760
        %v2777 = vpack.c.b16 %v2761, %v2761
        %v2778 = vpack.c.b16 %v2762, %v2762
        %v2779 = vpack.c.b16 %v2763, %v2763
        %v2780 = vpack.c.b16 %v2764, %v2764
        %v2781 = vpack.c.b16 %v2765, %v2765
        %v2782 = vpack.c.b16 %v2766, %v2766
        %v2783 = vpack.c.b16 %v2767, %v2767
        %2800 = vst [vmem:[%s285] sm:$0xf] %v2768
        %2801 = vst [vmem:[%s285 + $0x4] sm:$0xf] %v2769
        %2802 = vst [vmem:[%s285 + $0x8] sm:$0xf] %v2770
        %2803 = vst [vmem:[%s285 + $0xc] sm:$0xf] %v2771
        %2804 = vst [vmem:[%s285 + $0x10] sm:$0xf] %v2772
        %2805 = vst [vmem:[%s285 + $0x14] sm:$0xf] %v2773
        %2806 = vst [vmem:[%s285 + $0x18] sm:$0xf] %v2774
        %2807 = vst [vmem:[%s285 + $0x1c] sm:$0xf] %v2775
        %2808 = vst [vmem:[%s285 + $0x20] sm:$0xf] %v2776
        %2809 = vst [vmem:[%s285 + $0x24] sm:$0xf] %v2777
        %2810 = vst [vmem:[%s285 + $0x28] sm:$0xf] %v2778
        %2811 = vst [vmem:[%s285 + $0x2c] sm:$0xf] %v2779
        %2812 = vst [vmem:[%s285 + $0x30] sm:$0xf] %v2780
        %2813 = vst [vmem:[%s285 + $0x34] sm:$0xf] %v2781
        %2814 = vst [vmem:[%s285 + $0x38] sm:$0xf] %v2782
        %2815 = vst [vmem:[%s285 + $0x3c] sm:$0xf] %v2783
        %s2816 = sand.u32 %s195, 1
        %s2817 = scalar_lea.sflag [#allocation4], %s2816
        %s2818 = sand.u32 %s195, 1
        %s2819 = smul.addr %s2818, 64
        %s2820 = scalar_lea.vmem [#allocation3], %s2819
        // Predicated region
        $region49: #{bottleneck_forward.1} parent=47 // pred_check
          %p2821 = pneg %p205
        $region50: #{bottleneck_forward.1} parent=47 // pred_check_branch
          %2823 = sbr.rel (%p2821) target = $region52
        $region51: #{bottleneck_forward.1} parent=47 // pred_region
          %s2824 = smul.u32 8, %s26
          %s2826 = ssub.s32 1024, 1024
          %2827 = vsyncadd %s2817, %s2826
          %s2828 = smul.addr %s2824, 2
          %s2829 = smul.addr %s25, 32
          %s2830 = sadd.s32 %s2828, %s2829
          %s2831 = smul.addr %s2830, 64
          %s2832 = scalar_lea.hbm %s7, %s2831
          %s2833 = sshll.u32 %s2820, 4
          %s2834 = int_to_ptr.vmem [resolvable:$true] %s2833
          %2839 = dma.vmem_to_hbm [thread:$0]  %s2834, 1024, %s2832, %s2817, 64, 64, 4
        $region52: #{bottleneck_forward.1} parent=47 // pred_fallthru
          _
      $region48: #{bottleneck_forward.1} parent=5 // pred_fallthru
        _
      %p2840 = scmp.le.s32.totalorder 2, %s16
      // Predicated region
      $region53: #{bottleneck_forward.1} parent=5 // pred_check
        %p2841 = pneg %p2840
      $region54: #{bottleneck_forward.1} parent=5 // pred_check_branch
        %2843 = sbr.rel (%p2841) target = $region56
      $region55: #{bottleneck_forward.1} parent=5 // pred_region
        %s2844 = ssub.s32 %s16, 2
        // Predicated region
        $region57: #{bottleneck_forward.1} parent=55 // pred_check
          %p2845 = pneg %p211
        $region58: #{bottleneck_forward.1} parent=55 // pred_check_branch
          %2847 = sbr.rel (%p2845) target = $region60
        $region59: #{bottleneck_forward.1} parent=55 // pred_region
          %s2848 = sand.u32 %s196, 1
          %s2849 = scalar_lea.sflag [#allocation4], %s2848
          %s2850 = sand.u32 %s196, 1
          %s2851 = smul.addr %s2850, 64
          %s2852 = scalar_lea.vmem [#allocation3], %s2851
          %2853 = dma.done %s2849, 1024
        $region60: #{bottleneck_forward.1} parent=55 // pred_fallthru
          _
      $region56: #{bottleneck_forward.1} parent=5 // pred_fallthru
        _
    $region6: #{bottleneck_forward.1} parent=1 // loop_footer
      %s20 = sadd.s32 1, %s16
    $region7: #{bottleneck_forward.1} parent=1 // loop_footer_branch
      %15 = sbr.rel target = $region3
    $region8: #{bottleneck_forward.1} parent=1 // loop_exit
      _
    %2854 = vsyncpa [#allocation4], 1
    %s2855 = scalar_lea.sflag [#allocation4], 1
    %2856 = vsyncpa %s2855, 1

</llo_original>
